<compile_context>
chip_gen: v7x
topology: tpu7x:2x2x1
jax: 0.10.0
libtpu: 0.0.40
codegen_flags: <defaults>
</compile_context>

<pallas_src>
import functools
import math

import jax
import jax.numpy as jnp
from jax.experimental import pallas as pl
from jax.experimental.pallas import tpu as pltpu

NEG_SLOPE = 0.01      # nn.LeakyReLU default
BN_EPS = 1e-5         # nn.BatchNorm2d default
LANE = 128
LANE_CHUNK = 512      # lanes per fused matmul+epilogue chunk (keeps vregs comfy)


def _round_up(x, m):
    return -(-x // m) * m


# ----------------------------------------------------------------------------
# Fused kernel: in-VMEM tap gather -> matmul -> bias -> LeakyReLU -> bf16 store
# ----------------------------------------------------------------------------
def _causal_conv_kernel(x_ref, w_ref, b_ref, o_ref, x2_ref, *, offsets, cin):
    # x_ref : [1, Cin, FT]   f32   one batch element, spatially flattened (f*T + t)
    # w_ref : [Coutp, K]     f32   BN-folded weights, K = kH*kW*Cin (resident)
    # b_ref : [Coutp, 1]     f32   BN-folded bias (resident)
    # o_ref : [1, Coutp, FT] bf16
    # x2_ref: [K, FT]        f32   VMEM scratch holding the kH*kW shifted copies
    ft = x2_ref.shape[1]

    # Zero-fill once so the (unused) wrap-around tail of every row is defined.
    x2_ref[...] = jnp.zeros(x2_ref.shape, jnp.float32)

    # X2[tap*Cin + ci, q] = x[ci, q + offset(tap)], offset(tap) = i*T + j.
    # Built with plain lane-offset loads/stores -- the duplication stays in VMEM.
    for tap, off in enumerate(offsets):
        x2_ref[tap * cin:(tap + 1) * cin, 0:ft - off] = x_ref[0, :, off:ft]

    w = w_ref[...]        # [Coutp, K]
    bias = b_ref[...]     # [Coutp, 1] -> broadcasts over lanes

    # Chunk the lane axis so each matmul + f32 epilogue stays comfortably in vregs.
    for c0 in range(0, ft, LANE_CHUNK):
        c1 = min(ft, c0 + LANE_CHUNK)
        acc = jnp.dot(w, x2_ref[:, c0:c1], preferred_element_type=jnp.float32)
        y = acc + bias
        y = jnp.where(y >= 0.0, y, NEG_SLOPE * y)       # LeakyReLU
        o_ref[0, :, c0:c1] = y.astype(o_ref.dtype)      # lane-dense bf16 store


# ----------------------------------------------------------------------------
# One-time parameter preparation (BN fold + reshape + pad), outside hot path
# ----------------------------------------------------------------------------
def prepare_params(p):
    """Fold eval-mode BatchNorm into the conv weight/bias and lay the weight out
    as [Cout_pad8, kH*kW*Cin] f32 plus a [Cout_pad8, 1] f32 bias."""
    w, b = p["w"], p["b"]
    cout, cin, kh, kw = w.shape
    scale = p["gamma"] / jnp.sqrt(p["running_var"] + BN_EPS)
    w_f = w * scale[:, None, None, None]
    b_f = (b - p["running_mean"]) * scale + p["beta"]
    # K ordering = (kH, kW, Cin): tap-major / channel-minor, matching the
    # in-kernel shifted-copy row order.
    w2 = w_f.transpose(0, 2, 3, 1).reshape(cout, kh * kw * cin)
    coutp = _round_up(cout, 8)                # sublane alignment only, never 128
    w2 = jnp.pad(w2, ((0, coutp - cout), (0, 0))).astype(jnp.float32)
    bias = jnp.pad(b_f, (0, coutp - cout)).reshape(coutp, 1).astype(jnp.float32)
    return w2, bias


# ----------------------------------------------------------------------------
# CausalConvBlock forward
# ----------------------------------------------------------------------------
def causal_conv_block(w2, bias, x, *, cout, kernel_size, stride):
    """x: [B, Cin, F, T] -> LeakyReLU(BN(Conv2d(x, padding=0))): [B, Cout, F', T'] (bf16)."""
    kh, kw = kernel_size
    sh, sw = stride
    B, cin, F, T = x.shape
    Ho = (F - kh) // sh + 1
    Wo = (T - kw) // sw + 1
    coutp, K = w2.shape
    assert K == kh * kw * cin

    # Pad F to a multiple of sH so the output (Q, sH*T) split is exact.
    Fp = _round_up(F, sh)
    if Fp != F:
        x = jnp.pad(x, ((0, 0), (0, 0), (0, Fp - F), (0, 0)))
    ft = Fp * T
    x_flat = x.reshape(B, cin, ft)                       # free reshape, no copy
    # Pad the flattened spatial axis to a lane multiple (no-op when F*T % 128 == 0).
    ftp = _round_up(ft, LANE)
    if ftp != ft:
        x_flat = jnp.pad(x_flat, ((0, 0), (0, 0), (0, ftp - ft)))

    # Per-step VMEM budget: 2x input block + 2x output block + tap scratch.
    vmem_bytes = 2 * cin * ftp * 4 + 2 * coutp * ftp * 2 + K * ftp * 4
    # TODO(synk): for very large F*T, tile the flattened spatial axis (with a
    #             (kH-1)*T + kW - 1 halo) instead of one whole image per step.
    assert vmem_bytes < 8 * 1024 * 1024, vmem_bytes

    offsets = tuple(i * T + j for i in range(kh) for j in range(kw))
    kernel = functools.partial(_causal_conv_kernel, offsets=offsets, cin=cin)

    out = pl.pallas_call(
        kernel,
        out_shape=jax.ShapeDtypeStruct((B, coutp, ftp), jnp.bfloat16),
        grid=(B,),
        in_specs=[
            pl.BlockSpec((1, cin, ftp), lambda b: (b, 0, 0)),   # one image per step
            pl.BlockSpec((coutp, K), lambda b: (0, 0)),         # weights resident
            pl.BlockSpec((coutp, 1), lambda b: (0, 0)),         # bias resident
        ],
        out_specs=pl.BlockSpec((1, coutp, ftp), lambda b: (b, 0, 0)),
        scratch_shapes=[pltpu.VMEM((K, ftp), jnp.float32)],
        compiler_params=pltpu.CompilerParams(
            dimension_semantics=("parallel",),                  # megacore / v7x 2-TC
        ),
    )(x_flat, w2, bias)

    # out[b, co, ho*sH*T + wo*sW] is the conv result at (ho, wo): undo the flat
    # layout with a free reshape + cheap strided slice (no transposes).
    out = out[:, :, :ft].reshape(B, coutp, Fp // sh, sh * T)
    return out[:, :cout, :Ho, 0:Wo * sw:sw]                     # [B, Cout, Ho, Wo]


# ----------------------------------------------------------------------------
# Demo / correctness check
# ----------------------------------------------------------------------------
if __name__ == "__main__":
    key = jax.random.PRNGKey(0)
    kw_key, kb_key, kx_key = jax.random.split(key, 3)

    # Representative CUNet encoder block: Conv2d(4 -> 32, kernel=(6,2), stride=(2,1))
    B, Cin, F, T = 2, 4, 64, 16
    Cout, kernel_size, stride = 32, (6, 2), (2, 1)

    fan_in = Cin * kernel_size[0] * kernel_size[1]
    bound = 1.0 / math.sqrt(fan_in)
    raw = {
        "w": jax.random.uniform(kw_key, (Cout, Cin) + kernel_size, jnp.float32,
                                -bound, bound),
        "b": jax.random.uniform(kb_key, (Cout,), jnp.float32, -bound, bound),
        "gamma": jnp.ones((Cout,), jnp.float32),
        "beta": jnp.zeros((Cout,), jnp.float32),
        "running_mean": jnp.zeros((Cout,), jnp.float32),
        "running_var": jnp.ones((Cout,), jnp.float32),
    }
    x = jax.random.normal(kx_key, (B, Cin, F, T), jnp.float32)

    # Prep once (BN fold, reshape, pad) -- not in the per-call hot path.
    w2, bias = prepare_params(raw)

    fwd = jax.jit(functools.partial(causal_conv_block, cout=Cout,
                                    kernel_size=kernel_size, stride=stride))
    y = jax.block_until_ready(fwd(w2, bias, x))

    Ho = (F - kernel_size[0]) // stride[0] + 1
    Wo = (T - kernel_size[1]) // stride[1] + 1
    assert y.shape == (B, Cout, Ho, Wo), y.shape
    y_f32 = y.astype(jnp.float32)
    assert bool(jnp.all(jnp.isfinite(y_f32)))

    # Reference path (XLA conv) to sanity-check the fused kernel (bf16-output tolerance).
    ref = jax.lax.conv_general_dilated(
        x, raw["w"], window_strides=stride, padding="VALID",
        dimension_numbers=("NCHW", "OIHW", "NCHW"))
    ref = ref + raw["b"][None, :, None, None]
    scale = (raw["gamma"] / jnp.sqrt(raw["running_var"] + BN_EPS))[None, :, None, None]
    ref = (ref - raw["running_mean"][None, :, None, None]) * scale \
        + raw["beta"][None, :, None, None]
    ref = jnp.where(ref >= 0.0, ref, NEG_SLOPE * ref)
    max_err = float(jnp.max(jnp.abs(y_f32 - ref)))
    assert max_err < 0.08, max_err

    print("KERNEL_OK")
</pallas_src>

<mosaic_0001>
module attributes {stable_mosaic.version = 11 : i64} {
  func.func @_causal_conv_kernel(%arg0: i32, %arg1: memref<1x4x1024xf32, #tpu.memory_space<vmem>>, %arg2: memref<32x48xf32, #tpu.memory_space<vmem>>, %arg3: memref<32x1xf32, #tpu.memory_space<vmem>>, %arg4: memref<1x32x1024xbf16, #tpu.memory_space<vmem>>, %arg5: memref<48x1024xf32, #tpu.memory_space<vmem>>) attributes {dimension_semantics = [#tpu.dimension_semantics<parallel>], iteration_bounds = array<i64: 2>, scalar_prefetch = 0 : i64, scratch_operands = 1 : i64, tpu.core_type = #tpu.core_type<tc>, window_params = [{transform_indices = @transform_0, window_bounds = array<i64: 1, 4, 1024>}, {pipeline_mode = #tpu.pipeline_mode<synchronous>, transform_indices = @transform_1, window_bounds = array<i64: 32, 48>}, {pipeline_mode = #tpu.pipeline_mode<synchronous>, transform_indices = @transform_2, window_bounds = array<i64: 32, 1>}, {transform_indices = @transform_3, window_bounds = array<i64: 1, 32, 1024>}]} {
    %cst = arith.constant 0.000000e+00 : f32
    %0 = vector.broadcast %cst : f32 to vector<48x1024xf32>
    %c0 = arith.constant 0 : index
    %c0_0 = arith.constant 0 : index
    %1 = vector.load %arg5[%c0, %c0_0] : memref<48x1024xf32, #tpu.memory_space<vmem>>, vector<48x1024xf32>
    tpu.vector_store %arg5[%c0, %c0_0], %0 {strides = array<i32>} : memref<48x1024xf32, #tpu.memory_space<vmem>>, vector<48x1024xf32>,
    %c0_1 = arith.constant 0 : index
    %c0_2 = arith.constant 0 : index
    %c0_3 = arith.constant 0 : index
    %2 = vector.load %arg1[%c0_1, %c0_2, %c0_3] : memref<1x4x1024xf32, #tpu.memory_space<vmem>>, vector<1x4x1024xf32>
    %3 = vector.shape_cast %2 : vector<1x4x1024xf32> to vector<4x1024xf32>
    %c0_4 = arith.constant 0 : index
    %c0_5 = arith.constant 0 : index
    %4 = vector.load %arg5[%c0_4, %c0_5] : memref<48x1024xf32, #tpu.memory_space<vmem>>, vector<4x1024xf32>
    tpu.vector_store %arg5[%c0_4, %c0_5], %3 {strides = array<i32>} : memref<48x1024xf32, #tpu.memory_space<vmem>>, vector<4x1024xf32>,
    %c0_6 = arith.constant 0 : index
    %c0_7 = arith.constant 0 : index
    %c1 = arith.constant 1 : index
    %5 = vector.load %arg1[%c0_6, %c0_7, %c1] : memref<1x4x1024xf32, #tpu.memory_space<vmem>>, vector<1x4x1023xf32>
    %6 = vector.shape_cast %5 : vector<1x4x1023xf32> to vector<4x1023xf32>
    %c4 = arith.constant 4 : index
    %c0_8 = arith.constant 0 : index
    %7 = vector.load %arg5[%c4, %c0_8] : memref<48x1024xf32, #tpu.memory_space<vmem>>, vector<4x1023xf32>
    tpu.vector_store %arg5[%c4, %c0_8], %6 {strides = array<i32>} : memref<48x1024xf32, #tpu.memory_space<vmem>>, vector<4x1023xf32>,
    %c0_9 = arith.constant 0 : index
    %c0_10 = arith.constant 0 : index
    %c16 = arith.constant 16 : index
    %8 = vector.load %arg1[%c0_9, %c0_10, %c16] : memref<1x4x1024xf32, #tpu.memory_space<vmem>>, vector<1x4x1008xf32>
    %9 = vector.shape_cast %8 : vector<1x4x1008xf32> to vector<4x1008xf32>
    %c8 = arith.constant 8 : index
    %c0_11 = arith.constant 0 : index
    %10 = vector.load %arg5[%c8, %c0_11] : memref<48x1024xf32, #tpu.memory_space<vmem>>, vector<4x1008xf32>
    tpu.vector_store %arg5[%c8, %c0_11], %9 {strides = array<i32>} : memref<48x1024xf32, #tpu.memory_space<vmem>>, vector<4x1008xf32>,
    %c0_12 = arith.constant 0 : index
    %c0_13 = arith.constant 0 : index
    %c17 = arith.constant 17 : index
    %11 = vector.load %arg1[%c0_12, %c0_13, %c17] : memref<1x4x1024xf32, #tpu.memory_space<vmem>>, vector<1x4x1007xf32>
    %12 = vector.shape_cast %11 : vector<1x4x1007xf32> to vector<4x1007xf32>
    %c12 = arith.constant 12 : index
    %c0_14 = arith.constant 0 : index
    %13 = vector.load %arg5[%c12, %c0_14] : memref<48x1024xf32, #tpu.memory_space<vmem>>, vector<4x1007xf32>
    tpu.vector_store %arg5[%c12, %c0_14], %12 {strides = array<i32>} : memref<48x1024xf32, #tpu.memory_space<vmem>>, vector<4x1007xf32>,
    %c0_15 = arith.constant 0 : index
    %c0_16 = arith.constant 0 : index
    %c32 = arith.constant 32 : index
    %14 = vector.load %arg1[%c0_15, %c0_16, %c32] : memref<1x4x1024xf32, #tpu.memory_space<vmem>>, vector<1x4x992xf32>
    %15 = vector.shape_cast %14 : vector<1x4x992xf32> to vector<4x992xf32>
    %c16_17 = arith.constant 16 : index
    %c0_18 = arith.constant 0 : index
    %16 = vector.load %arg5[%c16_17, %c0_18] : memref<48x1024xf32, #tpu.memory_space<vmem>>, vector<4x992xf32>
    tpu.vector_store %arg5[%c16_17, %c0_18], %15 {strides = array<i32>} : memref<48x1024xf32, #tpu.memory_space<vmem>>, vector<4x992xf32>,
    %c0_19 = arith.constant 0 : index
    %c0_20 = arith.constant 0 : index
    %c33 = arith.constant 33 : index
    %17 = vector.load %arg1[%c0_19, %c0_20, %c33] : memref<1x4x1024xf32, #tpu.memory_space<vmem>>, vector<1x4x991xf32>
    %18 = vector.shape_cast %17 : vector<1x4x991xf32> to vector<4x991xf32>
    %c20 = arith.constant 20 : index
    %c0_21 = arith.constant 0 : index
    %19 = vector.load %arg5[%c20, %c0_21] : memref<48x1024xf32, #tpu.memory_space<vmem>>, vector<4x991xf32>
    tpu.vector_store %arg5[%c20, %c0_21], %18 {strides = array<i32>} : memref<48x1024xf32, #tpu.memory_space<vmem>>, vector<4x991xf32>,
    %c0_22 = arith.constant 0 : index
    %c0_23 = arith.constant 0 : index
    %c48 = arith.constant 48 : index
    %20 = vector.load %arg1[%c0_22, %c0_23, %c48] : memref<1x4x1024xf32, #tpu.memory_space<vmem>>, vector<1x4x976xf32>
    %21 = vector.shape_cast %20 : vector<1x4x976xf32> to vector<4x976xf32>
    %c24 = arith.constant 24 : index
    %c0_24 = arith.constant 0 : index
    %22 = vector.load %arg5[%c24, %c0_24] : memref<48x1024xf32, #tpu.memory_space<vmem>>, vector<4x976xf32>
    tpu.vector_store %arg5[%c24, %c0_24], %21 {strides = array<i32>} : memref<48x1024xf32, #tpu.memory_space<vmem>>, vector<4x976xf32>,
    %c0_25 = arith.constant 0 : index
    %c0_26 = arith.constant 0 : index
    %c49 = arith.constant 49 : index
    %23 = vector.load %arg1[%c0_25, %c0_26, %c49] : memref<1x4x1024xf32, #tpu.memory_space<vmem>>, vector<1x4x975xf32>
    %24 = vector.shape_cast %23 : vector<1x4x975xf32> to vector<4x975xf32>
    %c28 = arith.constant 28 : index
    %c0_27 = arith.constant 0 : index
    %25 = vector.load %arg5[%c28, %c0_27] : memref<48x1024xf32, #tpu.memory_space<vmem>>, vector<4x975xf32>
    tpu.vector_store %arg5[%c28, %c0_27], %24 {strides = array<i32>} : memref<48x1024xf32, #tpu.memory_space<vmem>>, vector<4x975xf32>,
    %c0_28 = arith.constant 0 : index
    %c0_29 = arith.constant 0 : index
    %c64 = arith.constant 64 : index
    %26 = vector.load %arg1[%c0_28, %c0_29, %c64] : memref<1x4x1024xf32, #tpu.memory_space<vmem>>, vector<1x4x960xf32>
    %27 = vector.shape_cast %26 : vector<1x4x960xf32> to vector<4x960xf32>
    %c32_30 = arith.constant 32 : index
    %c0_31 = arith.constant 0 : index
    %28 = vector.load %arg5[%c32_30, %c0_31] : memref<48x1024xf32, #tpu.memory_space<vmem>>, vector<4x960xf32>
    tpu.vector_store %arg5[%c32_30, %c0_31], %27 {strides = array<i32>} : memref<48x1024xf32, #tpu.memory_space<vmem>>, vector<4x960xf32>,
    %c0_32 = arith.constant 0 : index
    %c0_33 = arith.constant 0 : index
    %c65 = arith.constant 65 : index
    %29 = vector.load %arg1[%c0_32, %c0_33, %c65] : memref<1x4x1024xf32, #tpu.memory_space<vmem>>, vector<1x4x959xf32>
    %30 = vector.shape_cast %29 : vector<1x4x959xf32> to vector<4x959xf32>
    %c36 = arith.constant 36 : index
    %c0_34 = arith.constant 0 : index
    %31 = vector.load %arg5[%c36, %c0_34] : memref<48x1024xf32, #tpu.memory_space<vmem>>, vector<4x959xf32>
    tpu.vector_store %arg5[%c36, %c0_34], %30 {strides = array<i32>} : memref<48x1024xf32, #tpu.memory_space<vmem>>, vector<4x959xf32>,
    %c0_35 = arith.constant 0 : index
    %c0_36 = arith.constant 0 : index
    %c80 = arith.constant 80 : index
    %32 = vector.load %arg1[%c0_35, %c0_36, %c80] : memref<1x4x1024xf32, #tpu.memory_space<vmem>>, vector<1x4x944xf32>
    %33 = vector.shape_cast %32 : vector<1x4x944xf32> to vector<4x944xf32>
    %c40 = arith.constant 40 : index
    %c0_37 = arith.constant 0 : index
    %34 = vector.load %arg5[%c40, %c0_37] : memref<48x1024xf32, #tpu.memory_space<vmem>>, vector<4x944xf32>
    tpu.vector_store %arg5[%c40, %c0_37], %33 {strides = array<i32>} : memref<48x1024xf32, #tpu.memory_space<vmem>>, vector<4x944xf32>,
    %c0_38 = arith.constant 0 : index
    %c0_39 = arith.constant 0 : index
    %c81 = arith.constant 81 : index
    %35 = vector.load %arg1[%c0_38, %c0_39, %c81] : memref<1x4x1024xf32, #tpu.memory_space<vmem>>, vector<1x4x943xf32>
    %36 = vector.shape_cast %35 : vector<1x4x943xf32> to vector<4x943xf32>
    %c44 = arith.constant 44 : index
    %c0_40 = arith.constant 0 : index
    %37 = vector.load %arg5[%c44, %c0_40] : memref<48x1024xf32, #tpu.memory_space<vmem>>, vector<4x943xf32>
    tpu.vector_store %arg5[%c44, %c0_40], %36 {strides = array<i32>} : memref<48x1024xf32, #tpu.memory_space<vmem>>, vector<4x943xf32>,
    %c0_41 = arith.constant 0 : index
    %c0_42 = arith.constant 0 : index
    %38 = vector.load %arg2[%c0_41, %c0_42] : memref<32x48xf32, #tpu.memory_space<vmem>>, vector<32x48xf32>
    %c0_43 = arith.constant 0 : index
    %c0_44 = arith.constant 0 : index
    %39 = vector.load %arg3[%c0_43, %c0_44] : memref<32x1xf32, #tpu.memory_space<vmem>>, vector<32x1xf32>
    %c0_45 = arith.constant 0 : index
    %c0_46 = arith.constant 0 : index
    %40 = vector.load %arg5[%c0_45, %c0_46] : memref<48x1024xf32, #tpu.memory_space<vmem>>, vector<48x512xf32>
    %cst_47 = arith.constant dense<0.000000e+00> : vector<32x512xf32>
    %41 = tpu.matmul %38, %40, %cst_47 {dimension_numbers = #tpu.dot_dimension_numbers<[1], [0], [0], [1], [0, 0, 1, 1], [], []>} : vector<32x48xf32>, vector<48x512xf32>, vector<32x512xf32> -> vector<32x512xf32>
    %42 = vector.broadcast %39 : vector<32x1xf32> to vector<32x512xf32>
    %43 = arith.addf %41, %42 : vector<32x512xf32>
    %cst_48 = arith.constant 0.000000e+00 : f32
    %44 = vector.broadcast %cst_48 : f32 to vector<32x512xf32>
    %45 = arith.cmpf oge, %43, %44 : vector<32x512xf32>
    %cst_49 = arith.constant 0.00999999977 : f32
    %46 = vector.broadcast %cst_49 : f32 to vector<32x512xf32>
    %47 = arith.mulf %46, %43 : vector<32x512xf32>
    %48 = arith.select %45, %43, %47 : vector<32x512xi1>, vector<32x512xf32>
    %49 = arith.truncf %48 : vector<32x512xf32> to vector<32x512xbf16>
    %c0_50 = arith.constant 0 : index
    %c0_51 = arith.constant 0 : index
    %c0_52 = arith.constant 0 : index
    %50 = vector.load %arg4[%c0_50, %c0_51, %c0_52] : memref<1x32x1024xbf16, #tpu.memory_space<vmem>>, vector<1x32x512xbf16>
    %51 = vector.shape_cast %50 : vector<1x32x512xbf16> to vector<32x512xbf16>
    %52 = vector.shape_cast %49 : vector<32x512xbf16> to vector<1x32x512xbf16>
    tpu.vector_store %arg4[%c0_50, %c0_51, %c0_52], %52 {strides = array<i32>} : memref<1x32x1024xbf16, #tpu.memory_space<vmem>>, vector<1x32x512xbf16>,
    %c0_53 = arith.constant 0 : index
    %c512 = arith.constant 512 : index
    %53 = vector.load %arg5[%c0_53, %c512] : memref<48x1024xf32, #tpu.memory_space<vmem>>, vector<48x512xf32>
    %cst_54 = arith.constant dense<0.000000e+00> : vector<32x512xf32>
    %54 = tpu.matmul %38, %53, %cst_54 {dimension_numbers = #tpu.dot_dimension_numbers<[1], [0], [0], [1], [0, 0, 1, 1], [], []>} : vector<32x48xf32>, vector<48x512xf32>, vector<32x512xf32> -> vector<32x512xf32>
    %55 = vector.broadcast %39 : vector<32x1xf32> to vector<32x512xf32>
    %56 = arith.addf %54, %55 : vector<32x512xf32>
    %cst_55 = arith.constant 0.000000e+00 : f32
    %57 = vector.broadcast %cst_55 : f32 to vector<32x512xf32>
    %58 = arith.cmpf oge, %56, %57 : vector<32x512xf32>
    %cst_56 = arith.constant 0.00999999977 : f32
    %59 = vector.broadcast %cst_56 : f32 to vector<32x512xf32>
    %60 = arith.mulf %59, %56 : vector<32x512xf32>
    %61 = arith.select %58, %56, %60 : vector<32x512xi1>, vector<32x512xf32>
    %62 = arith.truncf %61 : vector<32x512xf32> to vector<32x512xbf16>
    %c0_57 = arith.constant 0 : index
    %c0_58 = arith.constant 0 : index
    %c512_59 = arith.constant 512 : index
    %63 = vector.load %arg4[%c0_57, %c0_58, %c512_59] : memref<1x32x1024xbf16, #tpu.memory_space<vmem>>, vector<1x32x512xbf16>
    %64 = vector.shape_cast %63 : vector<1x32x512xbf16> to vector<32x512xbf16>
    %65 = vector.shape_cast %62 : vector<32x512xbf16> to vector<1x32x512xbf16>
    tpu.vector_store %arg4[%c0_57, %c0_58, %c512_59], %65 {strides = array<i32>} : memref<1x32x1024xbf16, #tpu.memory_space<vmem>>, vector<1x32x512xbf16>,
    return
  }
  func.func @transform_0(%arg0: i32) -> (i32, i32, i32) {
    %c0_i32 = arith.constant 0 : i32
    %c0_i32_0 = arith.constant 0 : i32
    %c0_i32_1 = arith.constant 0 : i32
    return %arg0, %c0_i32, %c0_i32_0 : i32, i32, i32
  }
  func.func @transform_1(%arg0: i32) -> (i32, i32) {
    %c0_i32 = arith.constant 0 : i32
    %c0_i32_0 = arith.constant 0 : i32
    %c0_i32_1 = arith.constant 0 : i32
    return %c0_i32, %c0_i32_0 : i32, i32
  }
  func.func @transform_2(%arg0: i32) -> (i32, i32) {
    %c0_i32 = arith.constant 0 : i32
    %c0_i32_0 = arith.constant 0 : i32
    %c0_i32_1 = arith.constant 0 : i32
    return %c0_i32, %c0_i32_0 : i32, i32
  }
  func.func @transform_3(%arg0: i32) -> (i32, i32, i32) {
    %c0_i32 = arith.constant 0 : i32
    %c0_i32_0 = arith.constant 0 : i32
    %c0_i32_1 = arith.constant 0 : i32
    return %arg0, %c0_i32, %c0_i32_0 : i32, i32, i32
  }
}

</mosaic_0001>

<llo_original>
// kernel: causal_conv_block.1
$region0: #{causal_conv_block.1}
  #allocation0 [shape = 'u32[]', space=smem, size = 0x4, offset = 0x4, fixed_abs, tag = 'smem constant byte address 0x4 - core index']
  #allocation1 [shape = 'u32[144,128]{1,0:T(1,128)}', space=vmem, size = 0x12000, scoped, tag = 'internal scratch']
  #allocation2 [shape = 'f32[48,1024]{1,0:T(8,128)}', space=vmem, size = 0x30000, scoped, tag = 'scratch operand']
  %s0 = inlined_call_operand.vmem [shape: f32[2,4,1024], index: 0, kind: input, shape index: {}]
  %s1 = inlined_call_operand.vmem [shape: f32[32,48], index: 1, kind: input, shape index: {}]
  %s2 = inlined_call_operand.vmem [shape: f32[32,1], index: 2, kind: input, shape index: {}]
  %s3 = inlined_call_operand.vmem [shape: bf16[2,32,1024], index: 3, kind: output, shape index: {}]
  %s4 = sld [smem:[#allocation0]]
  $region45: #{causal_conv_block.1} parent=0
    _
  %s6 = ssub.s32 1, %s4
  %s7 = scalar_select 0, %s6, %s4
  loop: start=0, step=1, limit=4
  $region2: #{causal_conv_block.1} parent=0 // loop_pre_header
    _
  $region3: #{causal_conv_block.1} parent=0 // loop_header
    %s9 = sphi 0, %s13
    %p10 = scmp.ge.s32.totalorder %s9, 4
    %s19 = sphi 0, %s21
    %s22 = sphi 0, %s19
    %s23 = sphi 0, %s22
    %s39 = sphi 0, %s23
    %s43 = sphi 0, %s43
    %s45 = sphi 0, %s43
    %s46 = sphi 0, %s45
    %s60 = sphi 0, %s46
    %s64 = sphi 0, %s64
    %s66 = sphi 0, %s64
    %s67 = sphi 0, %s66
    %s81 = sphi 0, %s67
    %s87 = sphi 0, %s89
    %s90 = sphi 0, %s87
    %s91 = sphi 0, %s90
    %s107 = sphi 0, %s91
  $region4: #{causal_conv_block.1} parent=0 // loop_header_branch
    %12 = sbr.rel (%p10) target = $region8
  $region5: #{causal_conv_block.1} parent=0 // loop_body
    %s14 = ssub.s32 %s9, 1
    %s15 = ssub.s32 %s9, 2
    %s16 = sadd.s32 %s9, 1
    %s17 = ssub.s32 %s9, %s16
    %p18 = scmp.eq.s32.totalorder %s17, 0
    %s20 = sadd.s32 %s19, 1
    %s21 = scalar_select %p18, %s19, %s20
    %p24 = pneg %p18
    %p25 = scmp.eq.s32.totalorder %s9, 1
    %p26 = por %p24, %p25
    %p27 = scmp.ne.s32.totalorder %s19, %s22
    %p28 = scmp.eq.s32.totalorder %s9, 0
    %p29 = por %p27, %p28
    %p30 = scmp.ne.s32.totalorder %s19, %s22
    %p31 = scmp.eq.s32.totalorder %s14, 1
    %p32 = por %p30, %p31
    %p33 = scmp.ne.s32.totalorder %s22, %s23
    %p34 = scmp.eq.s32.totalorder %s14, 0
    %p35 = por %p33, %p34
    %p36 = scmp.ne.s32.totalorder %s22, %s23
    %p37 = scmp.eq.s32.totalorder %s15, 1
    %p38 = por %p36, %p37
    %p40 = scmp.ne.s32.totalorder %s23, %s39
    %p41 = scmp.eq.s32.totalorder %s15, 0
    %p42 = por %p40, %p41
    %s44 = sadd.s32 %s43, 1
    %p47 = scmp.eq.s32.totalorder %s9, 1
    %p48 = scmp.ne.s32.totalorder %s43, %s45
    %p49 = scmp.eq.s32.totalorder %s9, 0
    %p50 = por %p48, %p49
    %p51 = scmp.ne.s32.totalorder %s43, %s45
    %p52 = scmp.eq.s32.totalorder %s14, 1
    %p53 = por %p51, %p52
    %p54 = scmp.ne.s32.totalorder %s45, %s46
    %p55 = scmp.eq.s32.totalorder %s14, 0
    %p56 = por %p54, %p55
    %p57 = scmp.ne.s32.totalorder %s45, %s46
    %p58 = scmp.eq.s32.totalorder %s15, 1
    %p59 = por %p57, %p58
    %p61 = scmp.ne.s32.totalorder %s46, %s60
    %p62 = scmp.eq.s32.totalorder %s15, 0
    %p63 = por %p61, %p62
    %s65 = sadd.s32 %s64, 1
    %p68 = scmp.eq.s32.totalorder %s9, 1
    %p69 = scmp.ne.s32.totalorder %s64, %s66
    %p70 = scmp.eq.s32.totalorder %s9, 0
    %p71 = por %p69, %p70
    %p72 = scmp.ne.s32.totalorder %s64, %s66
    %p73 = scmp.eq.s32.totalorder %s14, 1
    %p74 = por %p72, %p73
    %p75 = scmp.ne.s32.totalorder %s66, %s67
    %p76 = scmp.eq.s32.totalorder %s14, 0
    %p77 = por %p75, %p76
    %p78 = scmp.ne.s32.totalorder %s66, %s67
    %p79 = scmp.eq.s32.totalorder %s15, 1
    %p80 = por %p78, %p79
    %p82 = scmp.ne.s32.totalorder %s67, %s81
    %p83 = scmp.eq.s32.totalorder %s15, 0
    %p84 = por %p82, %p83
    %s85 = ssub.s32 %s9, %s16
    %p86 = scmp.eq.s32.totalorder %s85, 0
    %s88 = sadd.s32 %s87, 1
    %s89 = scalar_select %p86, %s87, %s88
    %p92 = pneg %p86
    %p93 = scmp.eq.s32.totalorder %s9, 1
    %p94 = por %p92, %p93
    %p95 = scmp.ne.s32.totalorder %s87, %s90
    %p96 = scmp.eq.s32.totalorder %s9, 0
    %p97 = por %p95, %p96
    %p98 = scmp.ne.s32.totalorder %s87, %s90
    %p99 = scmp.eq.s32.totalorder %s14, 1
    %p100 = por %p98, %p99
    %p101 = scmp.ne.s32.totalorder %s90, %s91
    %p102 = scmp.eq.s32.totalorder %s14, 0
    %p103 = por %p101, %p102
    %p104 = scmp.ne.s32.totalorder %s90, %s91
    %p105 = scmp.eq.s32.totalorder %s15, 1
    %p106 = por %p104, %p105
    %p108 = scmp.ne.s32.totalorder %s91, %s107
    %p109 = scmp.eq.s32.totalorder %s15, 0
    %p110 = por %p108, %p109
    %p111 = scmp.le.s32.totalorder 1, %s9
    %p112 = scmp.lt.s32.totalorder %s9, 3
    %p113 = pnand %p111, %p112
    %p114 = pneg %p113
    // Predicated region
    $region9: #{causal_conv_block.1} parent=5 // pred_check
      _
    $region10: #{causal_conv_block.1} parent=5 // pred_check_branch
      %116 = sbr.rel (%p113) target = $region12
    $region11: #{causal_conv_block.1} parent=5 // pred_region
      %s117 = ssub.s32 %s9, 1
      // Predicated region
      $region13: #{causal_conv_block.1} parent=11 // pred_check
        %p118 = pneg %p56
      $region14: #{causal_conv_block.1} parent=11 // pred_check_branch
        %120 = sbr.rel (%p118) target = $region16
      $region15: #{causal_conv_block.1} parent=11 // pred_region
        _
      $region16: #{causal_conv_block.1} parent=11 // pred_fallthru
        _
      // Predicated region
      $region17: #{causal_conv_block.1} parent=11 // pred_check
        %p121 = pneg %p77
      $region18: #{causal_conv_block.1} parent=11 // pred_check_branch
        %123 = sbr.rel (%p121) target = $region20
      $region19: #{causal_conv_block.1} parent=11 // pred_region
        _
      $region20: #{causal_conv_block.1} parent=11 // pred_fallthru
        _
    $region12: #{causal_conv_block.1} parent=5 // pred_fallthru
      _
    %p124 = scmp.lt.s32.totalorder %s9, 2
    // Predicated region
    $region21: #{causal_conv_block.1} parent=5 // pred_check
      %p125 = pneg %p124
    $region22: #{causal_conv_block.1} parent=5 // pred_check_branch
      %127 = sbr.rel (%p125) target = $region24
    $region23: #{causal_conv_block.1} parent=5 // pred_region
      // Predicated region
      $region25: #{causal_conv_block.1} parent=23 // pred_check
        %p128 = pneg %p29
      $region26: #{causal_conv_block.1} parent=23 // pred_check_branch
        %130 = sbr.rel (%p128) target = $region28
      $region27: #{causal_conv_block.1} parent=23 // pred_region
        %p131 = scmp.lt.s32.totalorder %s9, 1
        %s132 = scalar_select %p131, %s9, 1
        %s133 = smul.addr %s132, 8
        %s134 = smul.addr %s133, 4
        %s135 = scalar_lea.vmem %s0, %s134
      $region28: #{causal_conv_block.1} parent=23 // pred_fallthru
        _
    $region24: #{causal_conv_block.1} parent=5 // pred_fallthru
      _
    %p136 = scmp.le.s32.totalorder 1, %s9
    %p137 = scmp.lt.s32.totalorder %s9, 3
    %p138 = pnand %p136, %p137
    %p139 = pneg %p138
    // Predicated region
    $region29: #{causal_conv_block.1} parent=5 // pred_check
      _
    $region30: #{causal_conv_block.1} parent=5 // pred_check_branch
      %141 = sbr.rel (%p138) target = $region32
    $region31: #{causal_conv_block.1} parent=5 // pred_region
      %s142 = ssub.s32 %s9, 1
      %p143 = scmp.lt.s32.totalorder %s14, 1
      %s144 = scalar_select %p143, %s14, 1
      %s145 = smul.addr %s144, 8
      %s146 = smul.addr %s145, 4
      %s147 = scalar_lea.vmem %s0, %s146
      %p148 = pneg %p35
      %p149 = pneg %p32
      %p150 = pneg %p56
      %p151 = pneg %p53
      %p152 = pneg %p77
      %p153 = pneg %p74
      %p154 = pneg %p103
      %p155 = pneg %p100
      %p156 = scmp.lt.s32.totalorder %s14, 1
      %s157 = scalar_select %p156, %s14, 1
      %s158 = smul.addr %s157, 32
      %s159 = smul.addr %s158, 4
      %s160 = scalar_lea.vmem %s3, %s159
      %p161 = scmp.lt.s32.totalorder %s14, 1
      %s162 = scalar_select %p161, %s14, 1
      %s163 = smul.addr %s162, 8
      %s164 = smul.addr %s163, 4
      %s165 = scalar_lea.vmem %s0, %s164
      %p166 = scmp.lt.s32.totalorder %s14, 1
      %s167 = scalar_select %p166, %s14, 1
      %s168 = smul.addr %s167, 32
      %s169 = smul.addr %s168, 4
      %s170 = scalar_lea.vmem %s3, %s169
      %171 = vst [vmem:[#allocation2] sm:$0xff] 0.0
      %172 = vst [vmem:[#allocation2 + $0x8] sm:$0xff] 0.0
      %173 = vst [vmem:[#allocation2 + $0x10] sm:$0xff] 0.0
      %174 = vst [vmem:[#allocation2 + $0x18] sm:$0xff] 0.0
      %175 = vst [vmem:[#allocation2 + $0x20] sm:$0xff] 0.0
      %176 = vst [vmem:[#allocation2 + $0x28] sm:$0xff] 0.0
      %177 = vst [vmem:[#allocation2 + $0x30] sm:$0xff] 0.0
      %178 = vst [vmem:[#allocation2 + $0x38] sm:$0xff] 0.0
      %179 = vst [vmem:[#allocation2 + $0x40] sm:$0xff] 0.0
      %180 = vst [vmem:[#allocation2 + $0x48] sm:$0xff] 0.0
      %181 = vst [vmem:[#allocation2 + $0x50] sm:$0xff] 0.0
      %182 = vst [vmem:[#allocation2 + $0x58] sm:$0xff] 0.0
      %183 = vst [vmem:[#allocation2 + $0x60] sm:$0xff] 0.0
      %184 = vst [vmem:[#allocation2 + $0x68] sm:$0xff] 0.0
      %185 = vst [vmem:[#allocation2 + $0x70] sm:$0xff] 0.0
      %186 = vst [vmem:[#allocation2 + $0x78] sm:$0xff] 0.0
      %187 = vst [vmem:[#allocation2 + $0x80] sm:$0xff] 0.0
      %188 = vst [vmem:[#allocation2 + $0x88] sm:$0xff] 0.0
      %189 = vst [vmem:[#allocation2 + $0x90] sm:$0xff] 0.0
      %190 = vst [vmem:[#allocation2 + $0x98] sm:$0xff] 0.0
      %191 = vst [vmem:[#allocation2 + $0xa0] sm:$0xff] 0.0
      %192 = vst [vmem:[#allocation2 + $0xa8] sm:$0xff] 0.0
      %193 = vst [vmem:[#allocation2 + $0xb0] sm:$0xff] 0.0
      %194 = vst [vmem:[#allocation2 + $0xb8] sm:$0xff] 0.0
      %195 = vst [vmem:[#allocation2 + $0xc0] sm:$0xff] 0.0
      %196 = vst [vmem:[#allocation2 + $0xc8] sm:$0xff] 0.0
      %197 = vst [vmem:[#allocation2 + $0xd0] sm:$0xff] 0.0
      %198 = vst [vmem:[#allocation2 + $0xd8] sm:$0xff] 0.0
      %199 = vst [vmem:[#allocation2 + $0xe0] sm:$0xff] 0.0
      %200 = vst [vmem:[#allocation2 + $0xe8] sm:$0xff] 0.0
      %201 = vst [vmem:[#allocation2 + $0xf0] sm:$0xff] 0.0
      %202 = vst [vmem:[#allocation2 + $0xf8] sm:$0xff] 0.0
      %203 = vst [vmem:[#allocation2 + $0x100] sm:$0xff] 0.0
      %204 = vst [vmem:[#allocation2 + $0x108] sm:$0xff] 0.0
      %205 = vst [vmem:[#allocation2 + $0x110] sm:$0xff] 0.0
      %206 = vst [vmem:[#allocation2 + $0x118] sm:$0xff] 0.0
      %207 = vst [vmem:[#allocation2 + $0x120] sm:$0xff] 0.0
      %208 = vst [vmem:[#allocation2 + $0x128] sm:$0xff] 0.0
      %209 = vst [vmem:[#allocation2 + $0x130] sm:$0xff] 0.0
      %210 = vst [vmem:[#allocation2 + $0x138] sm:$0xff] 0.0
      %211 = vst [vmem:[#allocation2 + $0x140] sm:$0xff] 0.0
      %212 = vst [vmem:[#allocation2 + $0x148] sm:$0xff] 0.0
      %213 = vst [vmem:[#allocation2 + $0x150] sm:$0xff] 0.0
      %214 = vst [vmem:[#allocation2 + $0x158] sm:$0xff] 0.0
      %215 = vst [vmem:[#allocation2 + $0x160] sm:$0xff] 0.0
      %216 = vst [vmem:[#allocation2 + $0x168] sm:$0xff] 0.0
      %217 = vst [vmem:[#allocation2 + $0x170] sm:$0xff] 0.0
      %218 = vst [vmem:[#allocation2 + $0x178] sm:$0xff] 0.0
      %v219 = vld [vmem:[%s165] sm:$0xff]
      %v220 = vld [vmem:[%s165 + $0x8] sm:$0xff]
      %v221 = vld [vmem:[%s165 + $0x10] sm:$0xff]
      %v222 = vld [vmem:[%s165 + $0x18] sm:$0xff]
      %v227 = vcombine.high %v219, %v219
      %v228 = vcombine.high %v220, %v220
      %v229 = vcombine.high %v221, %v221
      %v230 = vcombine.high %v222, %v222
      %235 = vst [vmem:[#allocation2] sm:$0xf] %v219
      %236 = vst [vmem:[#allocation2 + $0x8] sm:$0xf] %v227
      %237 = vst [vmem:[#allocation2 + $0x10] sm:$0xf] %v220
      %238 = vst [vmem:[#allocation2 + $0x18] sm:$0xf] %v228
      %239 = vst [vmem:[#allocation2 + $0x20] sm:$0xf] %v221
      %240 = vst [vmem:[#allocation2 + $0x28] sm:$0xf] %v229
      %241 = vst [vmem:[#allocation2 + $0x30] sm:$0xf] %v222
      %242 = vst [vmem:[#allocation2 + $0x38] sm:$0xf] %v230
      %v243 = vld [vmem:[%s165] sm:$0xff]
      %v244 = vld [vmem:[%s165 + $0x8] sm:$0xff]
      %v245 = vld [vmem:[%s165 + $0x10] sm:$0xff]
      %v246 = vld [vmem:[%s165 + $0x18] sm:$0xff]
      %v251 = vcombine.low %v243, %v243
      %v252 = vcombine.low %v244, %v244
      %v253 = vcombine.low %v245, %v245
      %v254 = vcombine.low %v246, %v246
      %255 = vrot.lane.b32.xlu0 %v251, 127
      %v256 = vpop.permute.xlu0 %255
      %257 = vrot.lane.b32.xlu0 %v243, 127
      %v258 = vpop.permute.xlu0 %257
      %259 = vrot.lane.b32.xlu0 %v252, 127
      %v260 = vpop.permute.xlu0 %259
      %261 = vrot.lane.b32.xlu0 %v244, 127
      %v262 = vpop.permute.xlu0 %261
      %263 = vrot.lane.b32.xlu0 %v253, 127
      %v264 = vpop.permute.xlu0 %263
      %265 = vrot.lane.b32.xlu0 %v245, 127
      %v266 = vpop.permute.xlu0 %265
      %267 = vrot.lane.b32.xlu0 %v254, 127
      %v268 = vpop.permute.xlu0 %267
      %269 = vrot.lane.b32.xlu0 %v246, 127
      %v270 = vpop.permute.xlu0 %269
      %vm271 = vcmask 1039360
      %v272 = vsel %vm271, %v256, %v258
      %v273 = vsel %vm271, %v258, %v260
      %v274 = vsel %vm271, %v260, %v262
      %v275 = vsel %vm271, %v262, %v264
      %v276 = vsel %vm271, %v264, %v266
      %v277 = vsel %vm271, %v266, %v268
      %v278 = vsel %vm271, %v268, %v270
      %287 = vst [vmem:[#allocation2] sm:$0xf0] %v272
      %288 = vst [vmem:[#allocation2 + $0x8] sm:$0xf0] %v273
      %289 = vst [vmem:[#allocation2 + $0x10] sm:$0xf0] %v274
      %290 = vst [vmem:[#allocation2 + $0x18] sm:$0xf0] %v275
      %291 = vst [vmem:[#allocation2 + $0x20] sm:$0xf0] %v276
      %292 = vst [vmem:[#allocation2 + $0x28] sm:$0xf0] %v277
      %293 = vst [vmem:[#allocation2 + $0x30] sm:$0xf0] %v278
      %vm294 = vcmask 1039364
      %295 = vst.msk [vmem:[#allocation2 + $0x38] sm:$0xf0] %vm294, %v270
      %v296 = vld [vmem:[%s165] sm:$0xff]
      %v297 = vld [vmem:[%s165 + $0x8] sm:$0xff]
      %v298 = vld [vmem:[%s165 + $0x10] sm:$0xff]
      %v299 = vld [vmem:[%s165 + $0x18] sm:$0xff]
      %v304 = vcombine.high %v296, %v296
      %v305 = vcombine.high %v297, %v297
      %v306 = vcombine.high %v298, %v298
      %v307 = vcombine.high %v299, %v299
      %308 = vrot.lane.b32.xlu0 %v296, 112
      %v309 = vpop.permute.xlu0 %308
      %310 = vrot.lane.b32.xlu0 %v304, 112
      %v311 = vpop.permute.xlu0 %310
      %312 = vrot.lane.b32.xlu0 %v297, 112
      %v313 = vpop.permute.xlu0 %312
      %314 = vrot.lane.b32.xlu0 %v305, 112
      %v315 = vpop.permute.xlu0 %314
      %316 = vrot.lane.b32.xlu0 %v298, 112
      %v317 = vpop.permute.xlu0 %316
      %318 = vrot.lane.b32.xlu0 %v306, 112
      %v319 = vpop.permute.xlu0 %318
      %320 = vrot.lane.b32.xlu0 %v299, 112
      %v321 = vpop.permute.xlu0 %320
      %322 = vrot.lane.b32.xlu0 %v307, 112
      %v323 = vpop.permute.xlu0 %322
      %vm324 = vcmask 916480
      %v325 = vsel %vm324, %v309, %v311
      %v326 = vsel %vm324, %v311, %v313
      %v327 = vsel %vm324, %v313, %v315
      %v328 = vsel %vm324, %v315, %v317
      %v329 = vsel %vm324, %v317, %v319
      %v330 = vsel %vm324, %v319, %v321
      %v331 = vsel %vm324, %v321, %v323
      %340 = vst [vmem:[#allocation2 + $0x40] sm:$0xf] %v325
      %341 = vst [vmem:[#allocation2 + $0x48] sm:$0xf] %v326
      %342 = vst [vmem:[#allocation2 + $0x50] sm:$0xf] %v327
      %343 = vst [vmem:[#allocation2 + $0x58] sm:$0xf] %v328
      %344 = vst [vmem:[#allocation2 + $0x60] sm:$0xf] %v329
      %345 = vst [vmem:[#allocation2 + $0x68] sm:$0xf] %v330
      %346 = vst [vmem:[#allocation2 + $0x70] sm:$0xf] %v331
      %vm347 = vcmask 912384
      %348 = vst.msk [vmem:[#allocation2 + $0x78] sm:$0xf] %vm347, %v323
      %v349 = vld [vmem:[%s165] sm:$0xff]
      %v350 = vld [vmem:[%s165 + $0x8] sm:$0xff]
      %v351 = vld [vmem:[%s165 + $0x10] sm:$0xff]
      %v352 = vld [vmem:[%s165 + $0x18] sm:$0xff]
      %v357 = vcombine.low %v349, %v349
      %v358 = vcombine.low %v350, %v350
      %v359 = vcombine.low %v351, %v351
      %v360 = vcombine.low %v352, %v352
      %361 = vrot.lane.b32.xlu0 %v357, 111
      %v362 = vpop.permute.xlu0 %361
      %363 = vrot.lane.b32.xlu0 %v349, 111
      %v364 = vpop.permute.xlu0 %363
      %365 = vrot.lane.b32.xlu0 %v358, 111
      %v366 = vpop.permute.xlu0 %365
      %367 = vrot.lane.b32.xlu0 %v350, 111
      %v368 = vpop.permute.xlu0 %367
      %369 = vrot.lane.b32.xlu0 %v359, 111
      %v370 = vpop.permute.xlu0 %369
      %371 = vrot.lane.b32.xlu0 %v351, 111
      %v372 = vpop.permute.xlu0 %371
      %373 = vrot.lane.b32.xlu0 %v360, 111
      %v374 = vpop.permute.xlu0 %373
      %375 = vrot.lane.b32.xlu0 %v352, 111
      %v376 = vpop.permute.xlu0 %375
      %vm377 = vcmask 908288
      %v378 = vsel %vm377, %v362, %v364
      %v379 = vsel %vm377, %v364, %v366
      %v380 = vsel %vm377, %v366, %v368
      %v381 = vsel %vm377, %v368, %v370
      %v382 = vsel %vm377, %v370, %v372
      %v383 = vsel %vm377, %v372, %v374
      %v384 = vsel %vm377, %v374, %v376
      %393 = vst [vmem:[#allocation2 + $0x40] sm:$0xf0] %v378
      %394 = vst [vmem:[#allocation2 + $0x48] sm:$0xf0] %v379
      %395 = vst [vmem:[#allocation2 + $0x50] sm:$0xf0] %v380
      %396 = vst [vmem:[#allocation2 + $0x58] sm:$0xf0] %v381
      %397 = vst [vmem:[#allocation2 + $0x60] sm:$0xf0] %v382
      %398 = vst [vmem:[#allocation2 + $0x68] sm:$0xf0] %v383
      %399 = vst [vmem:[#allocation2 + $0x70] sm:$0xf0] %v384
      %vm400 = vcmask 908292
      %401 = vst.msk [vmem:[#allocation2 + $0x78] sm:$0xf0] %vm400, %v376
      %v402 = vld [vmem:[%s165] sm:$0xff]
      %v403 = vld [vmem:[%s165 + $0x8] sm:$0xff]
      %v404 = vld [vmem:[%s165 + $0x10] sm:$0xff]
      %v405 = vld [vmem:[%s165 + $0x18] sm:$0xff]
      %v410 = vcombine.high %v402, %v402
      %v411 = vcombine.high %v403, %v403
      %v412 = vcombine.high %v404, %v404
      %v413 = vcombine.high %v405, %v405
      %414 = vrot.lane.b32.xlu0 %v402, 96
      %v415 = vpop.permute.xlu0 %414
      %416 = vrot.lane.b32.xlu0 %v410, 96
      %v417 = vpop.permute.xlu0 %416
      %418 = vrot.lane.b32.xlu0 %v403, 96
      %v419 = vpop.permute.xlu0 %418
      %420 = vrot.lane.b32.xlu0 %v411, 96
      %v421 = vpop.permute.xlu0 %420
      %422 = vrot.lane.b32.xlu0 %v404, 96
      %v423 = vpop.permute.xlu0 %422
      %424 = vrot.lane.b32.xlu0 %v412, 96
      %v425 = vpop.permute.xlu0 %424
      %426 = vrot.lane.b32.xlu0 %v405, 96
      %v427 = vpop.permute.xlu0 %426
      %428 = vrot.lane.b32.xlu0 %v413, 96
      %v429 = vpop.permute.xlu0 %428
      %vm430 = vcmask 785408
      %v431 = vsel %vm430, %v415, %v417
      %v432 = vsel %vm430, %v417, %v419
      %v433 = vsel %vm430, %v419, %v421
      %v434 = vsel %vm430, %v421, %v423
      %v435 = vsel %vm430, %v423, %v425
      %v436 = vsel %vm430, %v425, %v427
      %v437 = vsel %vm430, %v427, %v429
      %446 = vst [vmem:[#allocation2 + $0x80] sm:$0xf] %v431
      %447 = vst [vmem:[#allocation2 + $0x88] sm:$0xf] %v432
      %448 = vst [vmem:[#allocation2 + $0x90] sm:$0xf] %v433
      %449 = vst [vmem:[#allocation2 + $0x98] sm:$0xf] %v434
      %450 = vst [vmem:[#allocation2 + $0xa0] sm:$0xf] %v435
      %451 = vst [vmem:[#allocation2 + $0xa8] sm:$0xf] %v436
      %452 = vst [vmem:[#allocation2 + $0xb0] sm:$0xf] %v437
      %vm453 = vcmask 781312
      %454 = vst.msk [vmem:[#allocation2 + $0xb8] sm:$0xf] %vm453, %v429
      %v455 = vld [vmem:[%s165] sm:$0xff]
      %v456 = vld [vmem:[%s165 + $0x8] sm:$0xff]
      %v457 = vld [vmem:[%s165 + $0x10] sm:$0xff]
      %v458 = vld [vmem:[%s165 + $0x18] sm:$0xff]
      %v463 = vcombine.low %v455, %v455
      %v464 = vcombine.low %v456, %v456
      %v465 = vcombine.low %v457, %v457
      %v466 = vcombine.low %v458, %v458
      %467 = vrot.lane.b32.xlu0 %v463, 95
      %v468 = vpop.permute.xlu0 %467
      %469 = vrot.lane.b32.xlu0 %v455, 95
      %v470 = vpop.permute.xlu0 %469
      %471 = vrot.lane.b32.xlu0 %v464, 95
      %v472 = vpop.permute.xlu0 %471
      %473 = vrot.lane.b32.xlu0 %v456, 95
      %v474 = vpop.permute.xlu0 %473
      %475 = vrot.lane.b32.xlu0 %v465, 95
      %v476 = vpop.permute.xlu0 %475
      %477 = vrot.lane.b32.xlu0 %v457, 95
      %v478 = vpop.permute.xlu0 %477
      %479 = vrot.lane.b32.xlu0 %v466, 95
      %v480 = vpop.permute.xlu0 %479
      %481 = vrot.lane.b32.xlu0 %v458, 95
      %v482 = vpop.permute.xlu0 %481
      %vm483 = vcmask 777216
      %v484 = vsel %vm483, %v468, %v470
      %v485 = vsel %vm483, %v470, %v472
      %v486 = vsel %vm483, %v472, %v474
      %v487 = vsel %vm483, %v474, %v476
      %v488 = vsel %vm483, %v476, %v478
      %v489 = vsel %vm483, %v478, %v480
      %v490 = vsel %vm483, %v480, %v482
      %499 = vst [vmem:[#allocation2 + $0x80] sm:$0xf0] %v484
      %500 = vst [vmem:[#allocation2 + $0x88] sm:$0xf0] %v485
      %501 = vst [vmem:[#allocation2 + $0x90] sm:$0xf0] %v486
      %502 = vst [vmem:[#allocation2 + $0x98] sm:$0xf0] %v487
      %503 = vst [vmem:[#allocation2 + $0xa0] sm:$0xf0] %v488
      %504 = vst [vmem:[#allocation2 + $0xa8] sm:$0xf0] %v489
      %505 = vst [vmem:[#allocation2 + $0xb0] sm:$0xf0] %v490
      %vm506 = vcmask 777220
      %507 = vst.msk [vmem:[#allocation2 + $0xb8] sm:$0xf0] %vm506, %v482
      %v508 = vld [vmem:[%s165] sm:$0xff]
      %v509 = vld [vmem:[%s165 + $0x8] sm:$0xff]
      %v510 = vld [vmem:[%s165 + $0x10] sm:$0xff]
      %v511 = vld [vmem:[%s165 + $0x18] sm:$0xff]
      %v516 = vcombine.high %v508, %v508
      %v517 = vcombine.high %v509, %v509
      %v518 = vcombine.high %v510, %v510
      %v519 = vcombine.high %v511, %v511
      %520 = vrot.lane.b32.xlu0 %v508, 80
      %v521 = vpop.permute.xlu0 %520
      %522 = vrot.lane.b32.xlu0 %v516, 80
      %v523 = vpop.permute.xlu0 %522
      %524 = vrot.lane.b32.xlu0 %v509, 80
      %v525 = vpop.permute.xlu0 %524
      %526 = vrot.lane.b32.xlu0 %v517, 80
      %v527 = vpop.permute.xlu0 %526
      %528 = vrot.lane.b32.xlu0 %v510, 80
      %v529 = vpop.permute.xlu0 %528
      %530 = vrot.lane.b32.xlu0 %v518, 80
      %v531 = vpop.permute.xlu0 %530
      %532 = vrot.lane.b32.xlu0 %v511, 80
      %v533 = vpop.permute.xlu0 %532
      %534 = vrot.lane.b32.xlu0 %v519, 80
      %v535 = vpop.permute.xlu0 %534
      %vm536 = vcmask 654336
      %v537 = vsel %vm536, %v521, %v523
      %v538 = vsel %vm536, %v523, %v525
      %v539 = vsel %vm536, %v525, %v527
      %v540 = vsel %vm536, %v527, %v529
      %v541 = vsel %vm536, %v529, %v531
      %v542 = vsel %vm536, %v531, %v533
      %v543 = vsel %vm536, %v533, %v535
      %552 = vst [vmem:[#allocation2 + $0xc0] sm:$0xf] %v537
      %553 = vst [vmem:[#allocation2 + $0xc8] sm:$0xf] %v538
      %554 = vst [vmem:[#allocation2 + $0xd0] sm:$0xf] %v539
      %555 = vst [vmem:[#allocation2 + $0xd8] sm:$0xf] %v540
      %556 = vst [vmem:[#allocation2 + $0xe0] sm:$0xf] %v541
      %557 = vst [vmem:[#allocation2 + $0xe8] sm:$0xf] %v542
      %558 = vst [vmem:[#allocation2 + $0xf0] sm:$0xf] %v543
      %vm559 = vcmask 650240
      %560 = vst.msk [vmem:[#allocation2 + $0xf8] sm:$0xf] %vm559, %v535
      %v561 = vld [vmem:[%s165] sm:$0xff]
      %v562 = vld [vmem:[%s165 + $0x8] sm:$0xff]
      %v563 = vld [vmem:[%s165 + $0x10] sm:$0xff]
      %v564 = vld [vmem:[%s165 + $0x18] sm:$0xff]
      %v569 = vcombine.low %v561, %v561
      %v570 = vcombine.low %v562, %v562
      %v571 = vcombine.low %v563, %v563
      %v572 = vcombine.low %v564, %v564
      %573 = vrot.lane.b32.xlu0 %v569, 79
      %v574 = vpop.permute.xlu0 %573
      %575 = vrot.lane.b32.xlu0 %v561, 79
      %v576 = vpop.permute.xlu0 %575
      %577 = vrot.lane.b32.xlu0 %v570, 79
      %v578 = vpop.permute.xlu0 %577
      %579 = vrot.lane.b32.xlu0 %v562, 79
      %v580 = vpop.permute.xlu0 %579
      %581 = vrot.lane.b32.xlu0 %v571, 79
      %v582 = vpop.permute.xlu0 %581
      %583 = vrot.lane.b32.xlu0 %v563, 79
      %v584 = vpop.permute.xlu0 %583
      %585 = vrot.lane.b32.xlu0 %v572, 79
      %v586 = vpop.permute.xlu0 %585
      %587 = vrot.lane.b32.xlu0 %v564, 79
      %v588 = vpop.permute.xlu0 %587
      %vm589 = vcmask 646144
      %v590 = vsel %vm589, %v574, %v576
      %v591 = vsel %vm589, %v576, %v578
      %v592 = vsel %vm589, %v578, %v580
      %v593 = vsel %vm589, %v580, %v582
      %v594 = vsel %vm589, %v582, %v584
      %v595 = vsel %vm589, %v584, %v586
      %v596 = vsel %vm589, %v586, %v588
      %605 = vst [vmem:[#allocation2 + $0xc0] sm:$0xf0] %v590
      %606 = vst [vmem:[#allocation2 + $0xc8] sm:$0xf0] %v591
      %607 = vst [vmem:[#allocation2 + $0xd0] sm:$0xf0] %v592
      %608 = vst [vmem:[#allocation2 + $0xd8] sm:$0xf0] %v593
      %609 = vst [vmem:[#allocation2 + $0xe0] sm:$0xf0] %v594
      %610 = vst [vmem:[#allocation2 + $0xe8] sm:$0xf0] %v595
      %611 = vst [vmem:[#allocation2 + $0xf0] sm:$0xf0] %v596
      %vm612 = vcmask 646148
      %613 = vst.msk [vmem:[#allocation2 + $0xf8] sm:$0xf0] %vm612, %v588
      %v614 = vld [vmem:[%s165] sm:$0xff]
      %v615 = vld [vmem:[%s165 + $0x8] sm:$0xff]
      %v616 = vld [vmem:[%s165 + $0x10] sm:$0xff]
      %v617 = vld [vmem:[%s165 + $0x18] sm:$0xff]
      %v622 = vcombine.high %v614, %v614
      %v623 = vcombine.high %v615, %v615
      %v624 = vcombine.high %v616, %v616
      %v625 = vcombine.high %v617, %v617
      %626 = vrot.lane.b32.xlu0 %v614, 64
      %v627 = vpop.permute.xlu0 %626
      %628 = vrot.lane.b32.xlu0 %v622, 64
      %v629 = vpop.permute.xlu0 %628
      %630 = vrot.lane.b32.xlu0 %v615, 64
      %v631 = vpop.permute.xlu0 %630
      %632 = vrot.lane.b32.xlu0 %v623, 64
      %v633 = vpop.permute.xlu0 %632
      %634 = vrot.lane.b32.xlu0 %v616, 64
      %v635 = vpop.permute.xlu0 %634
      %636 = vrot.lane.b32.xlu0 %v624, 64
      %v637 = vpop.permute.xlu0 %636
      %638 = vrot.lane.b32.xlu0 %v617, 64
      %v639 = vpop.permute.xlu0 %638
      %640 = vrot.lane.b32.xlu0 %v625, 64
      %v641 = vpop.permute.xlu0 %640
      %vm642 = vcmask 523264
      %v643 = vsel %vm642, %v627, %v629
      %v644 = vsel %vm642, %v629, %v631
      %v645 = vsel %vm642, %v631, %v633
      %v646 = vsel %vm642, %v633, %v635
      %v647 = vsel %vm642, %v635, %v637
      %v648 = vsel %vm642, %v637, %v639
      %v649 = vsel %vm642, %v639, %v641
      %658 = vst [vmem:[#allocation2 + $0x100] sm:$0xf] %v643
      %659 = vst [vmem:[#allocation2 + $0x108] sm:$0xf] %v644
      %660 = vst [vmem:[#allocation2 + $0x110] sm:$0xf] %v645
      %661 = vst [vmem:[#allocation2 + $0x118] sm:$0xf] %v646
      %662 = vst [vmem:[#allocation2 + $0x120] sm:$0xf] %v647
      %663 = vst [vmem:[#allocation2 + $0x128] sm:$0xf] %v648
      %664 = vst [vmem:[#allocation2 + $0x130] sm:$0xf] %v649
      %vm665 = vcmask 519168
      %666 = vst.msk [vmem:[#allocation2 + $0x138] sm:$0xf] %vm665, %v641
      %v667 = vld [vmem:[%s165] sm:$0xff]
      %v668 = vld [vmem:[%s165 + $0x8] sm:$0xff]
      %v669 = vld [vmem:[%s165 + $0x10] sm:$0xff]
      %v670 = vld [vmem:[%s165 + $0x18] sm:$0xff]
      %v675 = vcombine.low %v667, %v667
      %v676 = vcombine.low %v668, %v668
      %v677 = vcombine.low %v669, %v669
      %v678 = vcombine.low %v670, %v670
      %679 = vrot.lane.b32.xlu0 %v675, 63
      %v680 = vpop.permute.xlu0 %679
      %681 = vrot.lane.b32.xlu0 %v667, 63
      %v682 = vpop.permute.xlu0 %681
      %683 = vrot.lane.b32.xlu0 %v676, 63
      %v684 = vpop.permute.xlu0 %683
      %685 = vrot.lane.b32.xlu0 %v668, 63
      %v686 = vpop.permute.xlu0 %685
      %687 = vrot.lane.b32.xlu0 %v677, 63
      %v688 = vpop.permute.xlu0 %687
      %689 = vrot.lane.b32.xlu0 %v669, 63
      %v690 = vpop.permute.xlu0 %689
      %691 = vrot.lane.b32.xlu0 %v678, 63
      %v692 = vpop.permute.xlu0 %691
      %693 = vrot.lane.b32.xlu0 %v670, 63
      %v694 = vpop.permute.xlu0 %693
      %vm695 = vcmask 515072
      %v696 = vsel %vm695, %v680, %v682
      %v697 = vsel %vm695, %v682, %v684
      %v698 = vsel %vm695, %v684, %v686
      %v699 = vsel %vm695, %v686, %v688
      %v700 = vsel %vm695, %v688, %v690
      %v701 = vsel %vm695, %v690, %v692
      %v702 = vsel %vm695, %v692, %v694
      %711 = vst [vmem:[#allocation2 + $0x100] sm:$0xf0] %v696
      %712 = vst [vmem:[#allocation2 + $0x108] sm:$0xf0] %v697
      %713 = vst [vmem:[#allocation2 + $0x110] sm:$0xf0] %v698
      %714 = vst [vmem:[#allocation2 + $0x118] sm:$0xf0] %v699
      %715 = vst [vmem:[#allocation2 + $0x120] sm:$0xf0] %v700
      %716 = vst [vmem:[#allocation2 + $0x128] sm:$0xf0] %v701
      %717 = vst [vmem:[#allocation2 + $0x130] sm:$0xf0] %v702
      %vm718 = vcmask 515076
      %719 = vst.msk [vmem:[#allocation2 + $0x138] sm:$0xf0] %vm718, %v694
      %v720 = vld [vmem:[%s165] sm:$0xff]
      %v721 = vld [vmem:[%s165 + $0x8] sm:$0xff]
      %v722 = vld [vmem:[%s165 + $0x10] sm:$0xff]
      %v723 = vld [vmem:[%s165 + $0x18] sm:$0xff]
      %v728 = vcombine.high %v720, %v720
      %v729 = vcombine.high %v721, %v721
      %v730 = vcombine.high %v722, %v722
      %v731 = vcombine.high %v723, %v723
      %732 = vrot.lane.b32.xlu0 %v720, 48
      %v733 = vpop.permute.xlu0 %732
      %734 = vrot.lane.b32.xlu0 %v728, 48
      %v735 = vpop.permute.xlu0 %734
      %736 = vrot.lane.b32.xlu0 %v721, 48
      %v737 = vpop.permute.xlu0 %736
      %738 = vrot.lane.b32.xlu0 %v729, 48
      %v739 = vpop.permute.xlu0 %738
      %740 = vrot.lane.b32.xlu0 %v722, 48
      %v741 = vpop.permute.xlu0 %740
      %742 = vrot.lane.b32.xlu0 %v730, 48
      %v743 = vpop.permute.xlu0 %742
      %744 = vrot.lane.b32.xlu0 %v723, 48
      %v745 = vpop.permute.xlu0 %744
      %746 = vrot.lane.b32.xlu0 %v731, 48
      %v747 = vpop.permute.xlu0 %746
      %vm748 = vcmask 392192
      %v749 = vsel %vm748, %v733, %v735
      %v750 = vsel %vm748, %v735, %v737
      %v751 = vsel %vm748, %v737, %v739
      %v752 = vsel %vm748, %v739, %v741
      %v753 = vsel %vm748, %v741, %v743
      %v754 = vsel %vm748, %v743, %v745
      %v755 = vsel %vm748, %v745, %v747
      %764 = vst [vmem:[#allocation2 + $0x140] sm:$0xf] %v749
      %765 = vst [vmem:[#allocation2 + $0x148] sm:$0xf] %v750
      %766 = vst [vmem:[#allocation2 + $0x150] sm:$0xf] %v751
      %767 = vst [vmem:[#allocation2 + $0x158] sm:$0xf] %v752
      %768 = vst [vmem:[#allocation2 + $0x160] sm:$0xf] %v753
      %769 = vst [vmem:[#allocation2 + $0x168] sm:$0xf] %v754
      %770 = vst [vmem:[#allocation2 + $0x170] sm:$0xf] %v755
      %vm771 = vcmask 388096
      %772 = vst.msk [vmem:[#allocation2 + $0x178] sm:$0xf] %vm771, %v747
      %v773 = vld [vmem:[%s165] sm:$0xff]
      %v774 = vld [vmem:[%s165 + $0x8] sm:$0xff]
      %v775 = vld [vmem:[%s165 + $0x10] sm:$0xff]
      %v776 = vld [vmem:[%s165 + $0x18] sm:$0xff]
      %v781 = vcombine.low %v773, %v773
      %v782 = vcombine.low %v774, %v774
      %v783 = vcombine.low %v775, %v775
      %v784 = vcombine.low %v776, %v776
      %785 = vrot.lane.b32.xlu0 %v781, 47
      %v786 = vpop.permute.xlu0 %785
      %787 = vrot.lane.b32.xlu0 %v773, 47
      %v788 = vpop.permute.xlu0 %787
      %789 = vrot.lane.b32.xlu0 %v782, 47
      %v790 = vpop.permute.xlu0 %789
      %791 = vrot.lane.b32.xlu0 %v774, 47
      %v792 = vpop.permute.xlu0 %791
      %793 = vrot.lane.b32.xlu0 %v783, 47
      %v794 = vpop.permute.xlu0 %793
      %795 = vrot.lane.b32.xlu0 %v775, 47
      %v796 = vpop.permute.xlu0 %795
      %797 = vrot.lane.b32.xlu0 %v784, 47
      %v798 = vpop.permute.xlu0 %797
      %799 = vrot.lane.b32.xlu0 %v776, 47
      %v800 = vpop.permute.xlu0 %799
      %vm801 = vcmask 384000
      %v802 = vsel %vm801, %v786, %v788
      %v803 = vsel %vm801, %v788, %v790
      %v804 = vsel %vm801, %v790, %v792
      %v805 = vsel %vm801, %v792, %v794
      %v806 = vsel %vm801, %v794, %v796
      %v807 = vsel %vm801, %v796, %v798
      %v808 = vsel %vm801, %v798, %v800
      %817 = vst [vmem:[#allocation2 + $0x140] sm:$0xf0] %v802
      %818 = vst [vmem:[#allocation2 + $0x148] sm:$0xf0] %v803
      %819 = vst [vmem:[#allocation2 + $0x150] sm:$0xf0] %v804
      %820 = vst [vmem:[#allocation2 + $0x158] sm:$0xf0] %v805
      %821 = vst [vmem:[#allocation2 + $0x160] sm:$0xf0] %v806
      %822 = vst [vmem:[#allocation2 + $0x168] sm:$0xf0] %v807
      %823 = vst [vmem:[#allocation2 + $0x170] sm:$0xf0] %v808
      %vm824 = vcmask 384004
      %825 = vst.msk [vmem:[#allocation2 + $0x178] sm:$0xf0] %vm824, %v800
      %v826 = vld [vmem:[%s1] sm:$0xff]
      %v827 = vld [vmem:[%s1 + $0x8] sm:$0xff]
      %v828 = vld [vmem:[%s1 + $0x10] sm:$0xff]
      %v829 = vld [vmem:[%s1 + $0x18] sm:$0xff]
      %v830 = vld [vmem:[%s2] sm:$0xff]
      %v831 = vld [vmem:[%s2 + $0x8] sm:$0xff]
      %v832 = vld [vmem:[%s2 + $0x10] sm:$0xff]
      %v833 = vld [vmem:[%s2 + $0x18] sm:$0xff]
      %v834 = vld [vmem:[#allocation2] sm:$0xff]
      %v835 = vld [vmem:[#allocation2 + $0x8] sm:$0xff]
      %v836 = vld [vmem:[#allocation2 + $0x10] sm:$0xff]
      %v837 = vld [vmem:[#allocation2 + $0x18] sm:$0xff]
      %v838 = vld [vmem:[#allocation2 + $0x40] sm:$0xff]
      %v839 = vld [vmem:[#allocation2 + $0x48] sm:$0xff]
      %v840 = vld [vmem:[#allocation2 + $0x50] sm:$0xff]
      %v841 = vld [vmem:[#allocation2 + $0x58] sm:$0xff]
      %v842 = vld [vmem:[#allocation2 + $0x80] sm:$0xff]
      %v843 = vld [vmem:[#allocation2 + $0x88] sm:$0xff]
      %v844 = vld [vmem:[#allocation2 + $0x90] sm:$0xff]
      %v845 = vld [vmem:[#allocation2 + $0x98] sm:$0xff]
      %v846 = vld [vmem:[#allocation2 + $0xc0] sm:$0xff]
      %v847 = vld [vmem:[#allocation2 + $0xc8] sm:$0xff]
      %v848 = vld [vmem:[#allocation2 + $0xd0] sm:$0xff]
      %v849 = vld [vmem:[#allocation2 + $0xd8] sm:$0xff]
      %v850 = vld [vmem:[#allocation2 + $0x100] sm:$0xff]
      %v851 = vld [vmem:[#allocation2 + $0x108] sm:$0xff]
      %v852 = vld [vmem:[#allocation2 + $0x110] sm:$0xff]
      %v853 = vld [vmem:[#allocation2 + $0x118] sm:$0xff]
      %v854 = vld [vmem:[#allocation2 + $0x140] sm:$0xff]
      %v855 = vld [vmem:[#allocation2 + $0x148] sm:$0xff]
      %v856 = vld [vmem:[#allocation2 + $0x150] sm:$0xff]
      %v857 = vld [vmem:[#allocation2 + $0x158] sm:$0xff]
      %859 = vset.pattern.permute.xlu0 0
      %860 = vperm.xlu0 %859, %v830
      %v861 = vpop.permute.xlu0 %860
      %864 = vset.pattern.permute.xlu0 0
      %865 = vperm.xlu0 %864, %v831
      %v866 = vpop.permute.xlu0 %865
      %869 = vset.pattern.permute.xlu0 0
      %870 = vperm.xlu0 %869, %v832
      %v871 = vpop.permute.xlu0 %870
      %874 = vset.pattern.permute.xlu0 0
      %875 = vperm.xlu0 %874, %v833
      %v876 = vpop.permute.xlu0 %875
      %v879 = vsel %vm748, %v826, 0
      %v882 = vsel %vm748, %v827, 0
      %v885 = vsel %vm748, %v828, 0
      %v888 = vsel %vm748, %v829, 0
      %890 = vmatprep.subr.mxu0 %v835
      %891 = vmatpush1.msra.mxu0 %v834
      %892 = vmatprep.subr.mxu0 %v839
      %893 = vmatpush1.msra.mxu0 %v838
      %894 = vmatprep.subr.mxu0 %v843
      %895 = vmatpush1.msra.mxu0 %v842
      %896 = vmatprep.subr.mxu0 %v847
      %897 = vmatpush1.msra.mxu0 %v846
      %898 = vmatprep.subr.mxu0 %v851
      %899 = vmatpush1.msra.mxu0 %v850
      %900 = vmatprep.subr.mxu0 %v855
      %901 = vmatpush1.msra.mxu0 %v854
      %902 = vmatprep.subr.mxu0 0.0
      %903 = vmatpush1.msra.mxu0 0.0
      %904 = vmatprep.subr.mxu0 0.0
      %905 = vmatpush1.msra.mxu0 0.0
      %906 = vmatprep.subr.mxu0 0.0
      %907 = vmatpush1.msra.mxu0 0.0
      %908 = vmatprep.subr.mxu0 0.0
      %909 = vmatpush1.msra.mxu0 0.0
      %910 = vmatprep.subr.mxu0 0.0
      %911 = vmatpush1.msra.mxu0 0.0
      %912 = vmatprep.subr.mxu0 0.0
      %913 = vmatpush1.msra.mxu0 0.0
      %914 = vmatprep.subr.mxu0 0.0
      %915 = vmatpush1.msra.mxu0 0.0
      %916 = vmatprep.subr.mxu0 0.0
      %917 = vmatpush1.msra.mxu0 0.0
      %918 = vmatprep.subr.mxu0 0.0
      %919 = vmatpush1.msra.mxu0 0.0
      %920 = vmatprep.subr.mxu0 0.0
      %921 = vmatpush1.msra.mxu0 0.0
      %922 = vmatprep.subr.mxu0 0.0
      %923 = vmatpush1.msra.mxu0 0.0
      %924 = vmatprep.subr.mxu0 0.0
      %925 = vmatpush1.msra.mxu0 0.0
      %926 = vmatprep.subr.mxu0 0.0
      %927 = vmatpush1.msra.mxu0 0.0
      %928 = vmatprep.subr.mxu0 0.0
      %929 = vmatpush1.msra.mxu0 0.0
      %930 = vmatprep.subr.mxu0 0.0
      %931 = vmatpush1.msra.mxu0 0.0
      %932 = vmatprep.subr.mxu0 0.0
      %933 = vmatpush1.msra.mxu0 0.0
      %934 = vmatprep.subr.mxu0 0.0
      %935 = vmatpush1.msra.mxu0 0.0
      %936 = vmatprep.subr.mxu0 0.0
      %937 = vmatpush1.msra.mxu0 0.0
      %938 = vmatprep.subr.mxu0 0.0
      %939 = vmatpush1.msra.mxu0 0.0
      %940 = vmatprep.subr.mxu0 0.0
      %941 = vmatpush1.msra.mxu0 0.0
      %942 = vmatprep.subr.mxu0 0.0
      %943 = vmatpush1.msra.mxu0 0.0
      %944 = vmatprep.subr.mxu0 0.0
      %945 = vmatpush1.msra.mxu0 0.0
      %946 = vmatprep.subr.mxu0 0.0
      %947 = vmatpush1.msra.mxu0 0.0
      %948 = vmatprep.subr.mxu0 0.0
      %949 = vmatpush1.msra.mxu0 0.0
      %950 = vmatprep.subr.mxu0 0.0
      %951 = vmatpush1.msra.mxu0 0.0
      %952 = vmatprep.subr.mxu0 0.0
      %953 = vmatpush1.msra.mxu0 0.0
      %954 = vmatprep.mubr.f32.mxu0 0.0
      %955 = vmatmul.mubr.f32.gmra.mrb[0].mxu0 %v879
      %v956 = vpop.f32.mrb[0].mxu0
      %v957 = vadd.f32 %v861, %v956
      %v958 = vpop.f32.mrb[0].mxu0
      %v959 = vadd.f32 %v861, %v958
      %960 = vmatprep.mubr.f32.mxu0 0.0
      %961 = vmatmul.mubr.f32.gmra.mrb[0].mxu0 %v882
      %v962 = vpop.f32.mrb[0].mxu0
      %v963 = vadd.f32 %v866, %v962
      %v964 = vpop.f32.mrb[0].mxu0
      %v965 = vadd.f32 %v866, %v964
      %966 = vmatprep.mubr.f32.mxu0 0.0
      %967 = vmatmul.mubr.f32.gmra.mrb[0].mxu0 %v885
      %v968 = vpop.f32.mrb[0].mxu0
      %v969 = vadd.f32 %v871, %v968
      %v970 = vpop.f32.mrb[0].mxu0
      %v971 = vadd.f32 %v871, %v970
      %972 = vmatprep.mubr.f32.mxu0 0.0
      %973 = vmatmul.mubr.f32.gmra.mrb[0].mxu0 %v888
      %v974 = vpop.f32.mrb[0].mxu0
      %v975 = vadd.f32 %v876, %v974
      %v976 = vpop.f32.mrb[0].mxu0
      %v977 = vadd.f32 %v876, %v976
      %978 = vdwg.mxu0
      %979 = vmatprep.subr.mxu0 %v837
      %980 = vmatpush1.msra.mxu0 %v836
      %981 = vmatprep.subr.mxu0 %v841
      %982 = vmatpush1.msra.mxu0 %v840
      %983 = vmatprep.subr.mxu0 %v845
      %984 = vmatpush1.msra.mxu0 %v844
      %985 = vmatprep.subr.mxu0 %v849
      %986 = vmatpush1.msra.mxu0 %v848
      %987 = vmatprep.subr.mxu0 %v853
      %988 = vmatpush1.msra.mxu0 %v852
      %989 = vmatprep.subr.mxu0 %v857
      %990 = vmatpush1.msra.mxu0 %v856
      %991 = vmatprep.subr.mxu0 0.0
      %992 = vmatpush1.msra.mxu0 0.0
      %993 = vmatprep.subr.mxu0 0.0
      %994 = vmatpush1.msra.mxu0 0.0
      %995 = vmatprep.subr.mxu0 0.0
      %996 = vmatpush1.msra.mxu0 0.0
      %997 = vmatprep.subr.mxu0 0.0
      %998 = vmatpush1.msra.mxu0 0.0
      %999 = vmatprep.subr.mxu0 0.0
      %1000 = vmatpush1.msra.mxu0 0.0
      %1001 = vmatprep.subr.mxu0 0.0
      %1002 = vmatpush1.msra.mxu0 0.0
      %1003 = vmatprep.subr.mxu0 0.0
      %1004 = vmatpush1.msra.mxu0 0.0
      %1005 = vmatprep.subr.mxu0 0.0
      %1006 = vmatpush1.msra.mxu0 0.0
      %1007 = vmatprep.subr.mxu0 0.0
      %1008 = vmatpush1.msra.mxu0 0.0
      %1009 = vmatprep.subr.mxu0 0.0
      %1010 = vmatpush1.msra.mxu0 0.0
      %1011 = vmatprep.subr.mxu0 0.0
      %1012 = vmatpush1.msra.mxu0 0.0
      %1013 = vmatprep.subr.mxu0 0.0
      %1014 = vmatpush1.msra.mxu0 0.0
      %1015 = vmatprep.subr.mxu0 0.0
      %1016 = vmatpush1.msra.mxu0 0.0
      %1017 = vmatprep.subr.mxu0 0.0
      %1018 = vmatpush1.msra.mxu0 0.0
      %1019 = vmatprep.subr.mxu0 0.0
      %1020 = vmatpush1.msra.mxu0 0.0
      %1021 = vmatprep.subr.mxu0 0.0
      %1022 = vmatpush1.msra.mxu0 0.0
      %1023 = vmatprep.subr.mxu0 0.0
      %1024 = vmatpush1.msra.mxu0 0.0
      %1025 = vmatprep.subr.mxu0 0.0
      %1026 = vmatpush1.msra.mxu0 0.0
      %1027 = vmatprep.subr.mxu0 0.0
      %1028 = vmatpush1.msra.mxu0 0.0
      %1029 = vmatprep.subr.mxu0 0.0
      %1030 = vmatpush1.msra.mxu0 0.0
      %1031 = vmatprep.subr.mxu0 0.0
      %1032 = vmatpush1.msra.mxu0 0.0
      %1033 = vmatprep.subr.mxu0 0.0
      %1034 = vmatpush1.msra.mxu0 0.0
      %1035 = vmatprep.subr.mxu0 0.0
      %1036 = vmatpush1.msra.mxu0 0.0
      %1037 = vmatprep.subr.mxu0 0.0
      %1038 = vmatpush1.msra.mxu0 0.0
      %1039 = vmatprep.subr.mxu0 0.0
      %1040 = vmatpush1.msra.mxu0 0.0
      %1041 = vmatprep.subr.mxu0 0.0
      %1042 = vmatpush1.msra.mxu0 0.0
      %1043 = vmatprep.mubr.f32.mxu0 0.0
      %1044 = vmatmul.mubr.f32.gmra.mrb[0].mxu0 %v879
      %v1045 = vpop.f32.mrb[0].mxu0
      %v1046 = vadd.f32 %v861, %v1045
      %v1047 = vpop.f32.mrb[0].mxu0
      %v1048 = vadd.f32 %v861, %v1047
      %1049 = vmatprep.mubr.f32.mxu0 0.0
      %1050 = vmatmul.mubr.f32.gmra.mrb[0].mxu0 %v882
      %v1051 = vpop.f32.mrb[0].mxu0
      %v1052 = vadd.f32 %v866, %v1051
      %v1053 = vpop.f32.mrb[0].mxu0
      %v1054 = vadd.f32 %v866, %v1053
      %1055 = vmatprep.mubr.f32.mxu0 0.0
      %1056 = vmatmul.mubr.f32.gmra.mrb[0].mxu0 %v885
      %v1057 = vpop.f32.mrb[0].mxu0
      %v1058 = vadd.f32 %v871, %v1057
      %v1059 = vpop.f32.mrb[0].mxu0
      %v1060 = vadd.f32 %v871, %v1059
      %1061 = vmatprep.mubr.f32.mxu0 0.0
      %1062 = vmatmul.mubr.f32.gmra.mrb[0].mxu0 %v888
      %v1063 = vpop.f32.mrb[0].mxu0
      %v1064 = vadd.f32 %v876, %v1063
      %v1065 = vpop.f32.mrb[0].mxu0
      %v1066 = vadd.f32 %v876, %v1065
      %1067 = vdwg.mxu0
      %vm1068 = vcmp.ge.f32.partialorder %v957, 0.0
      %vm1069 = vcmp.ge.f32.partialorder %v959, 0.0
      %vm1070 = vcmp.ge.f32.partialorder %v1046, 0.0
      %vm1071 = vcmp.ge.f32.partialorder %v1048, 0.0
      %vm1072 = vcmp.ge.f32.partialorder %v963, 0.0
      %vm1073 = vcmp.ge.f32.partialorder %v965, 0.0
      %vm1074 = vcmp.ge.f32.partialorder %v1052, 0.0
      %vm1075 = vcmp.ge.f32.partialorder %v1054, 0.0
      %vm1076 = vcmp.ge.f32.partialorder %v969, 0.0
      %vm1077 = vcmp.ge.f32.partialorder %v971, 0.0
      %vm1078 = vcmp.ge.f32.partialorder %v1058, 0.0
      %vm1079 = vcmp.ge.f32.partialorder %v1060, 0.0
      %vm1080 = vcmp.ge.f32.partialorder %v975, 0.0
      %vm1081 = vcmp.ge.f32.partialorder %v977, 0.0
      %vm1082 = vcmp.ge.f32.partialorder %v1064, 0.0
      %vm1083 = vcmp.ge.f32.partialorder %v1066, 0.0
      %v1084 = vmul.f32 %v957, 0.01
      %v1085 = vmul.f32 %v959, 0.01
      %v1086 = vmul.f32 %v1046, 0.01
      %v1087 = vmul.f32 %v1048, 0.01
      %v1088 = vmul.f32 %v963, 0.01
      %v1089 = vmul.f32 %v965, 0.01
      %v1090 = vmul.f32 %v1052, 0.01
      %v1091 = vmul.f32 %v1054, 0.01
      %v1092 = vmul.f32 %v969, 0.01
      %v1093 = vmul.f32 %v971, 0.01
      %v1094 = vmul.f32 %v1058, 0.01
      %v1095 = vmul.f32 %v1060, 0.01
      %v1096 = vmul.f32 %v975, 0.01
      %v1097 = vmul.f32 %v977, 0.01
      %v1098 = vmul.f32 %v1064, 0.01
      %v1099 = vmul.f32 %v1066, 0.01
      %v1100 = vsel %vm1068, %v957, %v1084
      %v1101 = vsel %vm1069, %v959, %v1085
      %v1102 = vsel %vm1070, %v1046, %v1086
      %v1103 = vsel %vm1071, %v1048, %v1087
      %v1104 = vsel %vm1072, %v963, %v1088
      %v1105 = vsel %vm1073, %v965, %v1089
      %v1106 = vsel %vm1074, %v1052, %v1090
      %v1107 = vsel %vm1075, %v1054, %v1091
      %v1108 = vsel %vm1076, %v969, %v1092
      %v1109 = vsel %vm1077, %v971, %v1093
      %v1110 = vsel %vm1078, %v1058, %v1094
      %v1111 = vsel %vm1079, %v1060, %v1095
      %v1112 = vsel %vm1080, %v975, %v1096
      %v1113 = vsel %vm1081, %v977, %v1097
      %v1114 = vsel %vm1082, %v1064, %v1098
      %v1115 = vsel %vm1083, %v1066, %v1099
      %v1116 = vpack.c.bf16 %v1104, %v1100
      %v1117 = vpack.c.bf16 %v1105, %v1101
      %v1118 = vpack.c.bf16 %v1106, %v1102
      %v1119 = vpack.c.bf16 %v1107, %v1103
      %v1120 = vpack.c.bf16 %v1112, %v1108
      %v1121 = vpack.c.bf16 %v1113, %v1109
      %v1122 = vpack.c.bf16 %v1114, %v1110
      %v1123 = vpack.c.bf16 %v1115, %v1111
      %v1132 = vunpack.c.l.b16 %v1116
      %v1133 = vunpack.c.l.b16 %v1117
      %v1134 = vunpack.c.l.b16 %v1118
      %v1135 = vunpack.c.l.b16 %v1119
      %v1136 = vunpack.c.h.b16 %v1116
      %v1137 = vunpack.c.h.b16 %v1117
      %v1138 = vunpack.c.h.b16 %v1118
      %v1139 = vunpack.c.h.b16 %v1119
      %v1140 = vunpack.c.l.b16 %v1120
      %v1141 = vunpack.c.l.b16 %v1121
      %v1142 = vunpack.c.l.b16 %v1122
      %v1143 = vunpack.c.l.b16 %v1123
      %v1144 = vunpack.c.h.b16 %v1120
      %v1145 = vunpack.c.h.b16 %v1121
      %v1146 = vunpack.c.h.b16 %v1122
      %v1147 = vunpack.c.h.b16 %v1123
      %v1148 = vpack.c.b16 %v1133, %v1132
      %v1149 = vpack.c.b16 %v1135, %v1134
      %v1150 = vpack.c.b16 %v1137, %v1136
      %v1151 = vpack.c.b16 %v1139, %v1138
      %v1152 = vpack.c.b16 %v1141, %v1140
      %v1153 = vpack.c.b16 %v1143, %v1142
      %v1154 = vpack.c.b16 %v1145, %v1144
      %v1155 = vpack.c.b16 %v1147, %v1146
      %1164 = vst [vmem:[%s170] sm:$0xff] %v1148
      %1165 = vst [vmem:[%s170 + $0x8] sm:$0xff] %v1149
      %1166 = vst [vmem:[%s170 + $0x20] sm:$0xff] %v1150
      %1167 = vst [vmem:[%s170 + $0x28] sm:$0xff] %v1151
      %1168 = vst [vmem:[%s170 + $0x40] sm:$0xff] %v1152
      %1169 = vst [vmem:[%s170 + $0x48] sm:$0xff] %v1153
      %1170 = vst [vmem:[%s170 + $0x60] sm:$0xff] %v1154
      %1171 = vst [vmem:[%s170 + $0x68] sm:$0xff] %v1155
      %v1172 = vld [vmem:[#allocation2 + $0x20] sm:$0xff]
      %v1173 = vld [vmem:[#allocation2 + $0x28] sm:$0xff]
      %v1174 = vld [vmem:[#allocation2 + $0x30] sm:$0xff]
      %v1175 = vld [vmem:[#allocation2 + $0x38] sm:$0xff]
      %v1176 = vld [vmem:[#allocation2 + $0x60] sm:$0xff]
      %v1177 = vld [vmem:[#allocation2 + $0x68] sm:$0xff]
      %v1178 = vld [vmem:[#allocation2 + $0x70] sm:$0xff]
      %v1179 = vld [vmem:[#allocation2 + $0x78] sm:$0xff]
      %v1180 = vld [vmem:[#allocation2 + $0xa0] sm:$0xff]
      %v1181 = vld [vmem:[#allocation2 + $0xa8] sm:$0xff]
      %v1182 = vld [vmem:[#allocation2 + $0xb0] sm:$0xff]
      %v1183 = vld [vmem:[#allocation2 + $0xb8] sm:$0xff]
      %v1184 = vld [vmem:[#allocation2 + $0xe0] sm:$0xff]
      %v1185 = vld [vmem:[#allocation2 + $0xe8] sm:$0xff]
      %v1186 = vld [vmem:[#allocation2 + $0xf0] sm:$0xff]
      %v1187 = vld [vmem:[#allocation2 + $0xf8] sm:$0xff]
      %v1188 = vld [vmem:[#allocation2 + $0x120] sm:$0xff]
      %v1189 = vld [vmem:[#allocation2 + $0x128] sm:$0xff]
      %v1190 = vld [vmem:[#allocation2 + $0x130] sm:$0xff]
      %v1191 = vld [vmem:[#allocation2 + $0x138] sm:$0xff]
      %v1192 = vld [vmem:[#allocation2 + $0x160] sm:$0xff]
      %v1193 = vld [vmem:[#allocation2 + $0x168] sm:$0xff]
      %v1194 = vld [vmem:[#allocation2 + $0x170] sm:$0xff]
      %v1195 = vld [vmem:[#allocation2 + $0x178] sm:$0xff]
      %1196 = vmatprep.subr.mxu0 %v1173
      %1197 = vmatpush1.msra.mxu0 %v1172
      %1198 = vmatprep.subr.mxu0 %v1177
      %1199 = vmatpush1.msra.mxu0 %v1176
      %1200 = vmatprep.subr.mxu0 %v1181
      %1201 = vmatpush1.msra.mxu0 %v1180
      %1202 = vmatprep.subr.mxu0 %v1185
      %1203 = vmatpush1.msra.mxu0 %v1184
      %1204 = vmatprep.subr.mxu0 %v1189
      %1205 = vmatpush1.msra.mxu0 %v1188
      %1206 = vmatprep.subr.mxu0 %v1193
      %1207 = vmatpush1.msra.mxu0 %v1192
      %1208 = vmatprep.subr.mxu0 0.0
      %1209 = vmatpush1.msra.mxu0 0.0
      %1210 = vmatprep.subr.mxu0 0.0
      %1211 = vmatpush1.msra.mxu0 0.0
      %1212 = vmatprep.subr.mxu0 0.0
      %1213 = vmatpush1.msra.mxu0 0.0
      %1214 = vmatprep.subr.mxu0 0.0
      %1215 = vmatpush1.msra.mxu0 0.0
      %1216 = vmatprep.subr.mxu0 0.0
      %1217 = vmatpush1.msra.mxu0 0.0
      %1218 = vmatprep.subr.mxu0 0.0
      %1219 = vmatpush1.msra.mxu0 0.0
      %1220 = vmatprep.subr.mxu0 0.0
      %1221 = vmatpush1.msra.mxu0 0.0
      %1222 = vmatprep.subr.mxu0 0.0
      %1223 = vmatpush1.msra.mxu0 0.0
      %1224 = vmatprep.subr.mxu0 0.0
      %1225 = vmatpush1.msra.mxu0 0.0
      %1226 = vmatprep.subr.mxu0 0.0
      %1227 = vmatpush1.msra.mxu0 0.0
      %1228 = vmatprep.subr.mxu0 0.0
      %1229 = vmatpush1.msra.mxu0 0.0
      %1230 = vmatprep.subr.mxu0 0.0
      %1231 = vmatpush1.msra.mxu0 0.0
      %1232 = vmatprep.subr.mxu0 0.0
      %1233 = vmatpush1.msra.mxu0 0.0
      %1234 = vmatprep.subr.mxu0 0.0
      %1235 = vmatpush1.msra.mxu0 0.0
      %1236 = vmatprep.subr.mxu0 0.0
      %1237 = vmatpush1.msra.mxu0 0.0
      %1238 = vmatprep.subr.mxu0 0.0
      %1239 = vmatpush1.msra.mxu0 0.0
      %1240 = vmatprep.subr.mxu0 0.0
      %1241 = vmatpush1.msra.mxu0 0.0
      %1242 = vmatprep.subr.mxu0 0.0
      %1243 = vmatpush1.msra.mxu0 0.0
      %1244 = vmatprep.subr.mxu0 0.0
      %1245 = vmatpush1.msra.mxu0 0.0
      %1246 = vmatprep.subr.mxu0 0.0
      %1247 = vmatpush1.msra.mxu0 0.0
      %1248 = vmatprep.subr.mxu0 0.0
      %1249 = vmatpush1.msra.mxu0 0.0
      %1250 = vmatprep.subr.mxu0 0.0
      %1251 = vmatpush1.msra.mxu0 0.0
      %1252 = vmatprep.subr.mxu0 0.0
      %1253 = vmatpush1.msra.mxu0 0.0
      %1254 = vmatprep.subr.mxu0 0.0
      %1255 = vmatpush1.msra.mxu0 0.0
      %1256 = vmatprep.subr.mxu0 0.0
      %1257 = vmatpush1.msra.mxu0 0.0
      %1258 = vmatprep.subr.mxu0 0.0
      %1259 = vmatpush1.msra.mxu0 0.0
      %1260 = vmatprep.mubr.f32.mxu0 0.0
      %1261 = vmatmul.mubr.f32.gmra.mrb[0].mxu0 %v879
      %v1262 = vpop.f32.mrb[0].mxu0
      %v1263 = vadd.f32 %v861, %v1262
      %v1264 = vpop.f32.mrb[0].mxu0
      %v1265 = vadd.f32 %v861, %v1264
      %1266 = vmatprep.mubr.f32.mxu0 0.0
      %1267 = vmatmul.mubr.f32.gmra.mrb[0].mxu0 %v882
      %v1268 = vpop.f32.mrb[0].mxu0
      %v1269 = vadd.f32 %v866, %v1268
      %v1270 = vpop.f32.mrb[0].mxu0
      %v1271 = vadd.f32 %v866, %v1270
      %1272 = vmatprep.mubr.f32.mxu0 0.0
      %1273 = vmatmul.mubr.f32.gmra.mrb[0].mxu0 %v885
      %v1274 = vpop.f32.mrb[0].mxu0
      %v1275 = vadd.f32 %v871, %v1274
      %v1276 = vpop.f32.mrb[0].mxu0
      %v1277 = vadd.f32 %v871, %v1276
      %1278 = vmatprep.mubr.f32.mxu0 0.0
      %1279 = vmatmul.mubr.f32.gmra.mrb[0].mxu0 %v888
      %v1280 = vpop.f32.mrb[0].mxu0
      %v1281 = vadd.f32 %v876, %v1280
      %v1282 = vpop.f32.mrb[0].mxu0
      %v1283 = vadd.f32 %v876, %v1282
      %1284 = vdwg.mxu0
      %1285 = vmatprep.subr.mxu0 %v1175
      %1286 = vmatpush1.msra.mxu0 %v1174
      %1287 = vmatprep.subr.mxu0 %v1179
      %1288 = vmatpush1.msra.mxu0 %v1178
      %1289 = vmatprep.subr.mxu0 %v1183
      %1290 = vmatpush1.msra.mxu0 %v1182
      %1291 = vmatprep.subr.mxu0 %v1187
      %1292 = vmatpush1.msra.mxu0 %v1186
      %1293 = vmatprep.subr.mxu0 %v1191
      %1294 = vmatpush1.msra.mxu0 %v1190
      %1295 = vmatprep.subr.mxu0 %v1195
      %1296 = vmatpush1.msra.mxu0 %v1194
      %1297 = vmatprep.subr.mxu0 0.0
      %1298 = vmatpush1.msra.mxu0 0.0
      %1299 = vmatprep.subr.mxu0 0.0
      %1300 = vmatpush1.msra.mxu0 0.0
      %1301 = vmatprep.subr.mxu0 0.0
      %1302 = vmatpush1.msra.mxu0 0.0
      %1303 = vmatprep.subr.mxu0 0.0
      %1304 = vmatpush1.msra.mxu0 0.0
      %1305 = vmatprep.subr.mxu0 0.0
      %1306 = vmatpush1.msra.mxu0 0.0
      %1307 = vmatprep.subr.mxu0 0.0
      %1308 = vmatpush1.msra.mxu0 0.0
      %1309 = vmatprep.subr.mxu0 0.0
      %1310 = vmatpush1.msra.mxu0 0.0
      %1311 = vmatprep.subr.mxu0 0.0
      %1312 = vmatpush1.msra.mxu0 0.0
      %1313 = vmatprep.subr.mxu0 0.0
      %1314 = vmatpush1.msra.mxu0 0.0
      %1315 = vmatprep.subr.mxu0 0.0
      %1316 = vmatpush1.msra.mxu0 0.0
      %1317 = vmatprep.subr.mxu0 0.0
      %1318 = vmatpush1.msra.mxu0 0.0
      %1319 = vmatprep.subr.mxu0 0.0
      %1320 = vmatpush1.msra.mxu0 0.0
      %1321 = vmatprep.subr.mxu0 0.0
      %1322 = vmatpush1.msra.mxu0 0.0
      %1323 = vmatprep.subr.mxu0 0.0
      %1324 = vmatpush1.msra.mxu0 0.0
      %1325 = vmatprep.subr.mxu0 0.0
      %1326 = vmatpush1.msra.mxu0 0.0
      %1327 = vmatprep.subr.mxu0 0.0
      %1328 = vmatpush1.msra.mxu0 0.0
      %1329 = vmatprep.subr.mxu0 0.0
      %1330 = vmatpush1.msra.mxu0 0.0
      %1331 = vmatprep.subr.mxu0 0.0
      %1332 = vmatpush1.msra.mxu0 0.0
      %1333 = vmatprep.subr.mxu0 0.0
      %1334 = vmatpush1.msra.mxu0 0.0
      %1335 = vmatprep.subr.mxu0 0.0
      %1336 = vmatpush1.msra.mxu0 0.0
      %1337 = vmatprep.subr.mxu0 0.0
      %1338 = vmatpush1.msra.mxu0 0.0
      %1339 = vmatprep.subr.mxu0 0.0
      %1340 = vmatpush1.msra.mxu0 0.0
      %1341 = vmatprep.subr.mxu0 0.0
      %1342 = vmatpush1.msra.mxu0 0.0
      %1343 = vmatprep.subr.mxu0 0.0
      %1344 = vmatpush1.msra.mxu0 0.0
      %1345 = vmatprep.subr.mxu0 0.0
      %1346 = vmatpush1.msra.mxu0 0.0
      %1347 = vmatprep.subr.mxu0 0.0
      %1348 = vmatpush1.msra.mxu0 0.0
      %1349 = vmatprep.mubr.f32.mxu0 0.0
      %1350 = vmatmul.mubr.f32.gmra.mrb[0].mxu0 %v879
      %v1351 = vpop.f32.mrb[0].mxu0
      %v1352 = vadd.f32 %v861, %v1351
      %v1353 = vpop.f32.mrb[0].mxu0
      %v1354 = vadd.f32 %v861, %v1353
      %1355 = vmatprep.mubr.f32.mxu0 0.0
      %1356 = vmatmul.mubr.f32.gmra.mrb[0].mxu0 %v882
      %v1357 = vpop.f32.mrb[0].mxu0
      %v1358 = vadd.f32 %v866, %v1357
      %v1359 = vpop.f32.mrb[0].mxu0
      %v1360 = vadd.f32 %v866, %v1359
      %1361 = vmatprep.mubr.f32.mxu0 0.0
      %1362 = vmatmul.mubr.f32.gmra.mrb[0].mxu0 %v885
      %v1363 = vpop.f32.mrb[0].mxu0
      %v1364 = vadd.f32 %v871, %v1363
      %v1365 = vpop.f32.mrb[0].mxu0
      %v1366 = vadd.f32 %v871, %v1365
      %1367 = vmatprep.mubr.f32.mxu0 0.0
      %1368 = vmatmul.mubr.f32.gmra.mrb[0].mxu0 %v888
      %v1369 = vpop.f32.mrb[0].mxu0
      %v1370 = vadd.f32 %v876, %v1369
      %v1371 = vpop.f32.mrb[0].mxu0
      %v1372 = vadd.f32 %v876, %v1371
      %1373 = vdwg.mxu0
      %vm1374 = vcmp.ge.f32.partialorder %v1263, 0.0
      %vm1375 = vcmp.ge.f32.partialorder %v1265, 0.0
      %vm1376 = vcmp.ge.f32.partialorder %v1352, 0.0
      %vm1377 = vcmp.ge.f32.partialorder %v1354, 0.0
      %vm1378 = vcmp.ge.f32.partialorder %v1269, 0.0
      %vm1379 = vcmp.ge.f32.partialorder %v1271, 0.0
      %vm1380 = vcmp.ge.f32.partialorder %v1358, 0.0
      %vm1381 = vcmp.ge.f32.partialorder %v1360, 0.0
      %vm1382 = vcmp.ge.f32.partialorder %v1275, 0.0
      %vm1383 = vcmp.ge.f32.partialorder %v1277, 0.0
      %vm1384 = vcmp.ge.f32.partialorder %v1364, 0.0
      %vm1385 = vcmp.ge.f32.partialorder %v1366, 0.0
      %vm1386 = vcmp.ge.f32.partialorder %v1281, 0.0
      %vm1387 = vcmp.ge.f32.partialorder %v1283, 0.0
      %vm1388 = vcmp.ge.f32.partialorder %v1370, 0.0
      %vm1389 = vcmp.ge.f32.partialorder %v1372, 0.0
      %v1390 = vmul.f32 %v1263, 0.01
      %v1391 = vmul.f32 %v1265, 0.01
      %v1392 = vmul.f32 %v1352, 0.01
      %v1393 = vmul.f32 %v1354, 0.01
      %v1394 = vmul.f32 %v1269, 0.01
      %v1395 = vmul.f32 %v1271, 0.01
      %v1396 = vmul.f32 %v1358, 0.01
      %v1397 = vmul.f32 %v1360, 0.01
      %v1398 = vmul.f32 %v1275, 0.01
      %v1399 = vmul.f32 %v1277, 0.01
      %v1400 = vmul.f32 %v1364, 0.01
      %v1401 = vmul.f32 %v1366, 0.01
      %v1402 = vmul.f32 %v1281, 0.01
      %v1403 = vmul.f32 %v1283, 0.01
      %v1404 = vmul.f32 %v1370, 0.01
      %v1405 = vmul.f32 %v1372, 0.01
      %v1406 = vsel %vm1374, %v1263, %v1390
      %v1407 = vsel %vm1375, %v1265, %v1391
      %v1408 = vsel %vm1376, %v1352, %v1392
      %v1409 = vsel %vm1377, %v1354, %v1393
      %v1410 = vsel %vm1378, %v1269, %v1394
      %v1411 = vsel %vm1379, %v1271, %v1395
      %v1412 = vsel %vm1380, %v1358, %v1396
      %v1413 = vsel %vm1381, %v1360, %v1397
      %v1414 = vsel %vm1382, %v1275, %v1398
      %v1415 = vsel %vm1383, %v1277, %v1399
      %v1416 = vsel %vm1384, %v1364, %v1400
      %v1417 = vsel %vm1385, %v1366, %v1401
      %v1418 = vsel %vm1386, %v1281, %v1402
      %v1419 = vsel %vm1387, %v1283, %v1403
      %v1420 = vsel %vm1388, %v1370, %v1404
      %v1421 = vsel %vm1389, %v1372, %v1405
      %v1422 = vpack.c.bf16 %v1410, %v1406
      %v1423 = vpack.c.bf16 %v1411, %v1407
      %v1424 = vpack.c.bf16 %v1412, %v1408
      %v1425 = vpack.c.bf16 %v1413, %v1409
      %v1426 = vpack.c.bf16 %v1418, %v1414
      %v1427 = vpack.c.bf16 %v1419, %v1415
      %v1428 = vpack.c.bf16 %v1420, %v1416
      %v1429 = vpack.c.bf16 %v1421, %v1417
      %v1438 = vunpack.c.l.b16 %v1422
      %v1439 = vunpack.c.l.b16 %v1423
      %v1440 = vunpack.c.l.b16 %v1424
      %v1441 = vunpack.c.l.b16 %v1425
      %v1442 = vunpack.c.h.b16 %v1422
      %v1443 = vunpack.c.h.b16 %v1423
      %v1444 = vunpack.c.h.b16 %v1424
      %v1445 = vunpack.c.h.b16 %v1425
      %v1446 = vunpack.c.l.b16 %v1426
      %v1447 = vunpack.c.l.b16 %v1427
      %v1448 = vunpack.c.l.b16 %v1428
      %v1449 = vunpack.c.l.b16 %v1429
      %v1450 = vunpack.c.h.b16 %v1426
      %v1451 = vunpack.c.h.b16 %v1427
      %v1452 = vunpack.c.h.b16 %v1428
      %v1453 = vunpack.c.h.b16 %v1429
      %v1454 = vpack.c.b16 %v1439, %v1438
      %v1455 = vpack.c.b16 %v1441, %v1440
      %v1456 = vpack.c.b16 %v1443, %v1442
      %v1457 = vpack.c.b16 %v1445, %v1444
      %v1458 = vpack.c.b16 %v1447, %v1446
      %v1459 = vpack.c.b16 %v1449, %v1448
      %v1460 = vpack.c.b16 %v1451, %v1450
      %v1461 = vpack.c.b16 %v1453, %v1452
      %1470 = vst [vmem:[%s170 + $0x10] sm:$0xff] %v1454
      %1471 = vst [vmem:[%s170 + $0x18] sm:$0xff] %v1455
      %1472 = vst [vmem:[%s170 + $0x30] sm:$0xff] %v1456
      %1473 = vst [vmem:[%s170 + $0x38] sm:$0xff] %v1457
      %1474 = vst [vmem:[%s170 + $0x50] sm:$0xff] %v1458
      %1475 = vst [vmem:[%s170 + $0x58] sm:$0xff] %v1459
      %1476 = vst [vmem:[%s170 + $0x70] sm:$0xff] %v1460
      %1477 = vst [vmem:[%s170 + $0x78] sm:$0xff] %v1461
      %p1478 = scmp.lt.s32.totalorder %s14, 1
      %s1479 = scalar_select %p1478, %s14, 1
      %s1480 = smul.addr %s1479, 32
      %s1481 = smul.addr %s1480, 4
      %s1482 = scalar_lea.vmem %s3, %s1481
      // Predicated region
      $region33: #{causal_conv_block.1} parent=31 // pred_check
        %p1483 = pneg %p100
      $region34: #{causal_conv_block.1} parent=31 // pred_check_branch
        %1485 = sbr.rel (%p1483) target = $region36
      $region35: #{causal_conv_block.1} parent=31 // pred_region
        _
      $region36: #{causal_conv_block.1} parent=31 // pred_fallthru
        _
    $region32: #{causal_conv_block.1} parent=5 // pred_fallthru
      _
    %p1486 = scmp.le.s32.totalorder 2, %s9
    // Predicated region
    $region37: #{causal_conv_block.1} parent=5 // pred_check
      %p1487 = pneg %p1486
    $region38: #{causal_conv_block.1} parent=5 // pred_check_branch
      %1489 = sbr.rel (%p1487) target = $region40
    $region39: #{causal_conv_block.1} parent=5 // pred_region
      %s1490 = ssub.s32 %s9, 2
      // Predicated region
      $region41: #{causal_conv_block.1} parent=39 // pred_check
        %p1491 = pneg %p106
      $region42: #{causal_conv_block.1} parent=39 // pred_check_branch
        %1493 = sbr.rel (%p1491) target = $region44
      $region43: #{causal_conv_block.1} parent=39 // pred_region
        %p1494 = scmp.lt.s32.totalorder %s15, 1
        %s1495 = scalar_select %p1494, %s15, 1
        %s1496 = smul.addr %s1495, 32
        %s1497 = smul.addr %s1496, 4
        %s1498 = scalar_lea.vmem %s3, %s1497
      $region44: #{causal_conv_block.1} parent=39 // pred_fallthru
        _
    $region40: #{causal_conv_block.1} parent=5 // pred_fallthru
      _
  $region6: #{causal_conv_block.1} parent=0 // loop_footer
    %s13 = sadd.s32 1, %s9
  $region7: #{causal_conv_block.1} parent=0 // loop_footer_branch
    %8 = sbr.rel target = $region3
  $region8: #{causal_conv_block.1} parent=0 // loop_exit
    _

</llo_original>
